<compile_context>
chip_gen: v6e
topology: v6e:2x2x1
jax: 0.10.0
libtpu: 0.0.40
codegen_flags: <defaults>
</compile_context>

<pallas_src>
import math
from functools import partial

import jax
import jax.numpy as jnp
from jax.experimental import pallas as pl
from jax.experimental.pallas import tpu as pltpu


def _round_up(x, m):
    return ((x + m - 1) // m) * m


def _tile_vmem_bytes(shape, dtype_bytes):
    """Rough VMEM footprint of one tile (last dim padded to 128 lanes,
    second-to-last to a multiple of 8 sublanes)."""
    shape = tuple(shape)
    if len(shape) < 2:
        shape = (1,) + shape
    lead = 1
    for d in shape[:-2]:
        lead *= d
    return lead * _round_up(shape[-2], 8) * _round_up(shape[-1], 128) * dtype_bytes


def _pick_cout_tile(cout, cap):
    """Full cout when under the cap, else the largest 16-aligned divisor <= cap."""
    if cout <= cap:
        return cout
    t = (cap // 16) * 16
    while t >= 16:
        if cout % t == 0:
            return t
        t -= 16
    return cout


def _pick_row_tile(h, w, k, cin, cout_t, x_bytes, w_bytes, wm_bytes, out_bytes,
                   budget_bytes):
    """Largest divisor of h whose per-step VMEM working set fits the budget."""
    w_pad = w + (k - 1)
    fixed = 2 * _tile_vmem_bytes((k * k, cout_t, cin), w_bytes)    # raw weight (dbl buf)
    fixed += _tile_vmem_bytes((k * k, cout_t, cin), wm_bytes)      # modulated-weight scratch
    fixed += _tile_vmem_bytes((k * k, cout_t, cin), 4)             # f32 modulation transients
    best = 1
    for h_t in range(1, h + 1):
        if h % h_t:
            continue
        var = 2 * _tile_vmem_bytes((cin, h_t + k - 1, w_pad), x_bytes)   # x tile (dbl buf)
        var += 2 * _tile_vmem_bytes((cout_t, h_t, w), out_bytes)         # out tile (dbl buf)
        var += 2 * _tile_vmem_bytes((cout_t, h_t * w), 4)                # f32 accumulator temps
        if fixed + var <= budget_bytes:
            best = h_t
    return best


def _modconv_kernel(x_ref, s_ref, w_ref, o_ref, wm_ref, *, k, c, eps, demodulate):
    # x_ref : (1, 1, cin, h_t + k - 1, W + k - 1)  halo'd row tile, compute dtype
    # s_ref : (1, 1, cin)                          per-batch style, f32
    # w_ref : (k*k, cout_t, cin)                   raw equalized weight (bf16 by default)
    # o_ref : (1, cout_t, 1, h_t, W)               output tile
    # wm_ref: (k*k, cout_t, cin)                   VMEM scratch: modulated+demodulated
    #                                              weight (compute dtype), carried
    #                                              across the inner spatial axis.
    _, cout_t, _, h_t, w_out = o_ref.shape
    cin = x_ref.shape[2]

    # Recompute the modulated weight only when (cout-tile, batch, spatial-outer)
    # changes, i.e. at the start of each inner spatial sweep (innermost axis).
    @pl.when(pl.program_id(3) == 0)
    def _():
        scale = s_ref[...].astype(jnp.float32) * c                    # (1, 1, cin)
        wmod = w_ref[...].astype(jnp.float32) * scale                 # (k*k, cout_t, cin)
        if demodulate:
            sig2 = jnp.sum(wmod * wmod, axis=2, keepdims=True)        # (k*k, cout_t, 1)
            sig2 = jnp.sum(sig2, axis=0, keepdims=True)               # (1,  cout_t, 1)
            wmod = wmod * jax.lax.rsqrt(sig2 + eps)
        wm_ref[...] = wmod.astype(wm_ref.dtype)

    # In-kernel im2col: one (cout_t, cin) x (cin, h_t*W) MXU dot per tap,
    # f32 accumulation.  N = h_t*W keeps the MXU filled even for small W.
    xt = x_ref[0, 0]                                                  # (cin, rows, W_pad)
    acc = jnp.zeros((cout_t, h_t * w_out), jnp.float32)
    for dy in range(k):
        for dx in range(k):
            seg = xt[:, dy:dy + h_t, dx:dx + w_out].reshape(cin, h_t * w_out)
            acc = acc + jnp.dot(wm_ref[dy * k + dx], seg,
                                preferred_element_type=jnp.float32)
    o_ref[...] = acc.reshape(1, cout_t, 1, h_t, w_out).astype(o_ref.dtype)


def conv2d_weight_modulate(x, s, weight, *, demodulate=True, eps=1e-8,
                           compute_dtype=jnp.bfloat16,
                           weight_dtype=jnp.bfloat16,
                           out_dtype=None,
                           cout_tile_cap=512,
                           row_tile=None,
                           vmem_budget_bytes=48 * 1024 * 1024,
                           vmem_limit_bytes=64 * 1024 * 1024):
    """x: [b, Cin, H, W], s: [b, Cin], weight: [Cout, Cin, k, k] -> [b, Cout, H, W]."""
    b, cin, h, w = x.shape
    cout, cin_w, k, k2 = weight.shape
    assert cin == cin_w and k == k2
    # Matches the PyTorch module; 'same' output only holds for odd kernel sizes.
    assert k % 2 == 1, "Conv2dWeightModulate assumes an odd kernel size"
    pad = (k - 1) // 2
    c = 1.0 / math.sqrt(cin * k * k)                      # EqualizedWeight scale
    w_pad = w + 2 * pad
    out_dtype = x.dtype if out_dtype is None else out_dtype

    # ---- tiling ----
    cout_t = _pick_cout_tile(cout, cout_tile_cap)         # full cout in practice
    if row_tile is not None:
        assert h % row_tile == 0
        h_t = row_tile
    else:
        h_t = _pick_row_tile(
            h, w, k, cin, cout_t,
            jnp.dtype(compute_dtype).itemsize, jnp.dtype(weight_dtype).itemsize,
            jnp.dtype(compute_dtype).itemsize, jnp.dtype(out_dtype).itemsize,
            vmem_budget_bytes)
    n_rt = h // h_t

    # Split the spatial axis into (parallel outer, arbitrary inner) when the
    # batch/cout grid alone cannot feed both v7x TensorCores.
    n_ro = 2 if ((cout // cout_t) * b < 2 and n_rt % 2 == 0) else 1
    n_ri = n_rt // n_ro

    # ---- layout-only glue (no modulation math here) ----
    # Non-overlapping row tiles with a (k-1)-row halo: ~(1 + (k-1)/h_t) x the
    # activation bytes instead of v2's k^2 x wrapper im2col blow-up.
    # TODO(synk): express the halo with overlapping-window BlockSpecs
    # (pl.Element row indexing) to drop even this duplication.
    x_pad = jnp.pad(x, ((0, 0), (0, 0), (pad, pad), (pad, pad)))
    if n_rt == 1:
        x_tiles = x_pad[:, None]
    else:
        x_tiles = jnp.stack(
            [x_pad[:, :, rt * h_t: rt * h_t + h_t + k - 1, :] for rt in range(n_rt)],
            axis=1)
    x_tiles = x_tiles.astype(compute_dtype)               # [b, n_rt, cin, h_t+k-1, W+2p]
    s_col = s.astype(jnp.float32)[:, None, :]             # [b, 1, cin]
    w_col = jnp.transpose(weight, (2, 3, 0, 1)).reshape(k * k, cout, cin)
    w_col = w_col.astype(weight_dtype)                    # [k*k, cout, cin]

    kernel = partial(_modconv_kernel, k=k, c=c, eps=eps, demodulate=demodulate)
    grid = (cout // cout_t, b, n_ro, n_ri)

    out = pl.pallas_call(
        kernel,
        out_shape=jax.ShapeDtypeStruct((b, cout, n_rt, h_t, w), out_dtype),
        grid_spec=pltpu.PrefetchScalarGridSpec(
            num_scalar_prefetch=0,
            grid=grid,
            in_specs=[
                # x tile: depends on (batch, spatial) only -> streamed once per cout tile.
                pl.BlockSpec((1, 1, cin, h_t + k - 1, w_pad),
                             lambda co, bi, ro, ri: (bi, ro * n_ri + ri, 0, 0, 0)),
                # style: depends on the batch index only.
                pl.BlockSpec((1, 1, cin), lambda co, bi, ro, ri: (bi, 0, 0)),
                # raw weight: depends on the cout tile only -> DMA'd once per cout
                # tile for the whole batch (grid order is (cout, batch, spatial)).
                pl.BlockSpec((k * k, cout_t, cin), lambda co, bi, ro, ri: (0, co, 0)),
            ],
            out_specs=pl.BlockSpec((1, cout_t, 1, h_t, w),
                                   lambda co, bi, ro, ri: (bi, co, ro * n_ri + ri, 0, 0)),
            scratch_shapes=[pltpu.VMEM((k * k, cout_t, cin), compute_dtype)],
        ),
        compiler_params=pltpu.CompilerParams(
            dimension_semantics=("parallel", "parallel", "parallel", "arbitrary"),
            vmem_limit_bytes=vmem_limit_bytes),
    )(x_tiles, s_col, w_col)

    return out.reshape(b, cout, h, w)


def _reference(x, s, weight, *, demodulate=True, eps=1e-8):
    """Pure-JAX reference mirroring the PyTorch forward (all f32)."""
    b, cin, h, w = x.shape
    cout, _, k, _ = weight.shape
    pad = (k - 1) // 2
    c = 1.0 / math.sqrt(cin * k * k)
    wm = weight[None] * c * s[:, None, :, None, None]          # [b, cout, cin, k, k]
    if demodulate:
        wm = wm * jax.lax.rsqrt(jnp.sum(wm ** 2, axis=(2, 3, 4), keepdims=True) + eps)
    xp = jnp.pad(x, ((0, 0), (0, 0), (pad, pad), (pad, pad)))
    out = jnp.zeros((b, cout, h, w), x.dtype)
    for dy in range(k):
        for dx in range(k):
            out = out + jnp.einsum('noc,nchw->nohw', wm[:, :, :, dy, dx],
                                   xp[:, :, dy:dy + h, dx:dx + w])
    return out


if __name__ == "__main__":
    b, cin, cout, H, W, k = 2, 4, 4, 16, 16, 3

    key = jax.random.PRNGKey(0)
    kx, ks, kw = jax.random.split(key, 3)
    x = jax.random.normal(kx, (b, cin, H, W), dtype=jnp.float32)
    s = jax.random.normal(ks, (b, cin), dtype=jnp.float32) + 1.0
    weight = jax.random.normal(kw, (cout, cin, k, k), dtype=jnp.float32)

    # Test 1: default path (auto row tile -> whole image in one tile, batch=2).
    ref = _reference(x, s, weight, demodulate=True, eps=1e-8)
    out = conv2d_weight_modulate(x, s, weight, demodulate=True, eps=1e-8)
    out = jax.block_until_ready(out)
    assert out.shape == (b, cout, H, W)
    # Tolerance reflects bf16 operand rounding (weight + activations); structural
    # or indexing bugs would produce O(1) mismatches and still be caught.
    assert jnp.allclose(out, ref, atol=5e-2, rtol=5e-2), "mismatch vs reference (test 1)"

    # Test 2: batch=1 with forced multi-row tiles -> exercises halo'd tiles,
    # in-kernel im2col across tile edges, and the megacore spatial split.
    x1, s1 = x[:1], s[:1]
    ref1 = _reference(x1, s1, weight, demodulate=True, eps=1e-8)
    out1 = conv2d_weight_modulate(x1, s1, weight, demodulate=True, eps=1e-8, row_tile=4)
    out1 = jax.block_until_ready(out1)
    assert out1.shape == (1, cout, H, W)
    assert jnp.allclose(out1, ref1, atol=5e-2, rtol=5e-2), "mismatch vs reference (test 2)"

    print("KERNEL_OK")
</pallas_src>

<mosaic_0001>
module attributes {stable_mosaic.version = 11 : i64} {
  func.func @_modconv_kernel(%arg0: i32, %arg1: i32, %arg2: i32, %arg3: i32, %arg4: memref<1x1x4x18x18xbf16, #tpu.memory_space<vmem>>, %arg5: memref<1x1x4xf32, #tpu.memory_space<vmem>>, %arg6: memref<9x4x4xbf16, #tpu.memory_space<vmem>>, %arg7: memref<1x4x1x16x16xf32, #tpu.memory_space<vmem>>, %arg8: memref<9x4x4xbf16, #tpu.memory_space<vmem>>) attributes {dimension_semantics = [#tpu.dimension_semantics<parallel>, #tpu.dimension_semantics<parallel>, #tpu.dimension_semantics<parallel>, #tpu.dimension_semantics<arbitrary>], iteration_bounds = array<i64: 1, 2, 1, 1>, scalar_prefetch = 0 : i64, scratch_operands = 1 : i64, tpu.core_type = #tpu.core_type<tc>, window_params = [{transform_indices = @transform_0, window_bounds = array<i64: 1, 1, 4, 18, 18>}, {transform_indices = @transform_1, window_bounds = array<i64: 1, 1, 4>}, {transform_indices = @transform_2, window_bounds = array<i64: 9, 4, 4>}, {transform_indices = @transform_3, window_bounds = array<i64: 1, 4, 1, 16, 16>}]} {
    %c0_i32 = arith.constant 0 : i32
    %0 = arith.cmpi eq, %arg3, %c0_i32 : i32
    %1 = arith.extui %0 : i1 to i32
    %c0_i32_0 = arith.constant 0 : i32
    %2 = arith.cmpi ne, %1, %c0_i32_0 : i32
    scf.if %2 {
      %c0_38 = arith.constant 0 : index
      %c0_39 = arith.constant 0 : index
      %c0_40 = arith.constant 0 : index
      %62 = vector.load %arg5[%c0_38, %c0_39, %c0_40] : memref<1x1x4xf32, #tpu.memory_space<vmem>>, vector<1x1x4xf32>
      %cst_41 = arith.constant 0.166666672 : f32
      %63 = vector.broadcast %cst_41 : f32 to vector<1x1x4xf32>
      %64 = arith.mulf %62, %63 : vector<1x1x4xf32>
      %c0_42 = arith.constant 0 : index
      %c0_43 = arith.constant 0 : index
      %c0_44 = arith.constant 0 : index
      %65 = vector.load %arg6[%c0_42, %c0_43, %c0_44] : memref<9x4x4xbf16, #tpu.memory_space<vmem>>, vector<9x4x4xbf16>
      %66 = arith.extf %65 : vector<9x4x4xbf16> to vector<9x4x4xf32>
      %67 = vector.broadcast %64 : vector<1x1x4xf32> to vector<9x4x4xf32>
      %68 = arith.mulf %66, %67 : vector<9x4x4xf32>
      %69 = arith.mulf %68, %68 : vector<9x4x4xf32>
      %cst_45 = arith.constant dense<0.000000e+00> : vector<9x4xf32>
      %70 = vector.multi_reduction <add>, %69, %cst_45 [2] : vector<9x4x4xf32> to vector<9x4xf32>
      %71 = vector.shape_cast %70 : vector<9x4xf32> to vector<9x4x1xf32>
      %cst_46 = arith.constant dense<0.000000e+00> : vector<4x1xf32>
      %72 = vector.multi_reduction <add>, %71, %cst_46 [0] : vector<9x4x1xf32> to vector<4x1xf32>
      %73 = vector.shape_cast %72 : vector<4x1xf32> to vector<1x4x1xf32>
      %cst_47 = arith.constant 9.99999993E-9 : f32
      %74 = vector.broadcast %cst_47 : f32 to vector<1x4x1xf32>
      %75 = arith.addf %73, %74 : vector<1x4x1xf32>
      %76 = math.rsqrt %75 : vector<1x4x1xf32>
      %77 = vector.broadcast %76 : vector<1x4x1xf32> to vector<9x4x4xf32>
      %78 = arith.mulf %68, %77 : vector<9x4x4xf32>
      %79 = arith.truncf %78 : vector<9x4x4xf32> to vector<9x4x4xbf16>
      %c0_48 = arith.constant 0 : index
      %c0_49 = arith.constant 0 : index
      %c0_50 = arith.constant 0 : index
      %80 = vector.load %arg8[%c0_48, %c0_49, %c0_50] : memref<9x4x4xbf16, #tpu.memory_space<vmem>>, vector<9x4x4xbf16>
      tpu.vector_store %arg8[%c0_48, %c0_49, %c0_50], %79 {strides = array<i32>} : memref<9x4x4xbf16, #tpu.memory_space<vmem>>, vector<9x4x4xbf16>,
    } else {
    }
    %c0 = arith.constant 0 : index
    %c0_1 = arith.constant 0 : index
    %c0_2 = arith.constant 0 : index
    %c0_3 = arith.constant 0 : index
    %c0_4 = arith.constant 0 : index
    %3 = vector.load %arg4[%c0, %c0_1, %c0_2, %c0_3, %c0_4] : memref<1x1x4x18x18xbf16, #tpu.memory_space<vmem>>, vector<1x1x4x18x18xbf16>
    %4 = vector.shape_cast %3 : vector<1x1x4x18x18xbf16> to vector<4x18x18xbf16>
    %cst = arith.constant 0.000000e+00 : f32
    %5 = vector.broadcast %cst : f32 to vector<4x256xf32>
    %6 = vector.extract_strided_slice %4 {offsets = [0, 0, 0], sizes = [4, 16, 16], strides = [1, 1, 1]} : vector<4x18x18xbf16> to vector<4x16x16xbf16>
    %7 = vector.shape_cast %6 : vector<4x16x16xbf16> to vector<4x256xbf16>
    %c0_5 = arith.constant 0 : index
    %c0_6 = arith.constant 0 : index
    %c0_7 = arith.constant 0 : index
    %8 = vector.load %arg8[%c0_5, %c0_6, %c0_7] : memref<9x4x4xbf16, #tpu.memory_space<vmem>>, vector<1x4x4xbf16>
    %9 = vector.shape_cast %8 : vector<1x4x4xbf16> to vector<4x4xbf16>
    %cst_8 = arith.constant dense<0.000000e+00> : vector<4x256xf32>
    %10 = tpu.matmul %9, %7, %cst_8 {dimension_numbers = #tpu.dot_dimension_numbers<[1], [0], [0], [1], [0, 0, 1, 1], [], []>} : vector<4x4xbf16>, vector<4x256xbf16>, vector<4x256xf32> -> vector<4x256xf32>
    %11 = arith.addf %5, %10 : vector<4x256xf32>
    %12 = vector.extract_strided_slice %4 {offsets = [0, 0, 1], sizes = [4, 16, 16], strides = [1, 1, 1]} : vector<4x18x18xbf16> to vector<4x16x16xbf16>
    %13 = vector.shape_cast %12 : vector<4x16x16xbf16> to vector<4x256xbf16>
    %c1 = arith.constant 1 : index
    %c0_9 = arith.constant 0 : index
    %c0_10 = arith.constant 0 : index
    %14 = vector.load %arg8[%c1, %c0_9, %c0_10] : memref<9x4x4xbf16, #tpu.memory_space<vmem>>, vector<1x4x4xbf16>
    %15 = vector.shape_cast %14 : vector<1x4x4xbf16> to vector<4x4xbf16>
    %cst_11 = arith.constant dense<0.000000e+00> : vector<4x256xf32>
    %16 = tpu.matmul %15, %13, %cst_11 {dimension_numbers = #tpu.dot_dimension_numbers<[1], [0], [0], [1], [0, 0, 1, 1], [], []>} : vector<4x4xbf16>, vector<4x256xbf16>, vector<4x256xf32> -> vector<4x256xf32>
    %17 = arith.addf %11, %16 : vector<4x256xf32>
    %18 = vector.extract_strided_slice %4 {offsets = [0, 0, 2], sizes = [4, 16, 16], strides = [1, 1, 1]} : vector<4x18x18xbf16> to vector<4x16x16xbf16>
    %19 = vector.shape_cast %18 : vector<4x16x16xbf16> to vector<4x256xbf16>
    %c2 = arith.constant 2 : index
    %c0_12 = arith.constant 0 : index
    %c0_13 = arith.constant 0 : index
    %20 = vector.load %arg8[%c2, %c0_12, %c0_13] : memref<9x4x4xbf16, #tpu.memory_space<vmem>>, vector<1x4x4xbf16>
    %21 = vector.shape_cast %20 : vector<1x4x4xbf16> to vector<4x4xbf16>
    %cst_14 = arith.constant dense<0.000000e+00> : vector<4x256xf32>
    %22 = tpu.matmul %21, %19, %cst_14 {dimension_numbers = #tpu.dot_dimension_numbers<[1], [0], [0], [1], [0, 0, 1, 1], [], []>} : vector<4x4xbf16>, vector<4x256xbf16>, vector<4x256xf32> -> vector<4x256xf32>
    %23 = arith.addf %17, %22 : vector<4x256xf32>
    %24 = vector.extract_strided_slice %4 {offsets = [0, 1, 0], sizes = [4, 16, 16], strides = [1, 1, 1]} : vector<4x18x18xbf16> to vector<4x16x16xbf16>
    %25 = vector.shape_cast %24 : vector<4x16x16xbf16> to vector<4x256xbf16>
    %c3 = arith.constant 3 : index
    %c0_15 = arith.constant 0 : index
    %c0_16 = arith.constant 0 : index
    %26 = vector.load %arg8[%c3, %c0_15, %c0_16] : memref<9x4x4xbf16, #tpu.memory_space<vmem>>, vector<1x4x4xbf16>
    %27 = vector.shape_cast %26 : vector<1x4x4xbf16> to vector<4x4xbf16>
    %cst_17 = arith.constant dense<0.000000e+00> : vector<4x256xf32>
    %28 = tpu.matmul %27, %25, %cst_17 {dimension_numbers = #tpu.dot_dimension_numbers<[1], [0], [0], [1], [0, 0, 1, 1], [], []>} : vector<4x4xbf16>, vector<4x256xbf16>, vector<4x256xf32> -> vector<4x256xf32>
    %29 = arith.addf %23, %28 : vector<4x256xf32>
    %30 = vector.extract_strided_slice %4 {offsets = [0, 1, 1], sizes = [4, 16, 16], strides = [1, 1, 1]} : vector<4x18x18xbf16> to vector<4x16x16xbf16>
    %31 = vector.shape_cast %30 : vector<4x16x16xbf16> to vector<4x256xbf16>
    %c4 = arith.constant 4 : index
    %c0_18 = arith.constant 0 : index
    %c0_19 = arith.constant 0 : index
    %32 = vector.load %arg8[%c4, %c0_18, %c0_19] : memref<9x4x4xbf16, #tpu.memory_space<vmem>>, vector<1x4x4xbf16>
    %33 = vector.shape_cast %32 : vector<1x4x4xbf16> to vector<4x4xbf16>
    %cst_20 = arith.constant dense<0.000000e+00> : vector<4x256xf32>
    %34 = tpu.matmul %33, %31, %cst_20 {dimension_numbers = #tpu.dot_dimension_numbers<[1], [0], [0], [1], [0, 0, 1, 1], [], []>} : vector<4x4xbf16>, vector<4x256xbf16>, vector<4x256xf32> -> vector<4x256xf32>
    %35 = arith.addf %29, %34 : vector<4x256xf32>
    %36 = vector.extract_strided_slice %4 {offsets = [0, 1, 2], sizes = [4, 16, 16], strides = [1, 1, 1]} : vector<4x18x18xbf16> to vector<4x16x16xbf16>
    %37 = vector.shape_cast %36 : vector<4x16x16xbf16> to vector<4x256xbf16>
    %c5 = arith.constant 5 : index
    %c0_21 = arith.constant 0 : index
    %c0_22 = arith.constant 0 : index
    %38 = vector.load %arg8[%c5, %c0_21, %c0_22] : memref<9x4x4xbf16, #tpu.memory_space<vmem>>, vector<1x4x4xbf16>
    %39 = vector.shape_cast %38 : vector<1x4x4xbf16> to vector<4x4xbf16>
    %cst_23 = arith.constant dense<0.000000e+00> : vector<4x256xf32>
    %40 = tpu.matmul %39, %37, %cst_23 {dimension_numbers = #tpu.dot_dimension_numbers<[1], [0], [0], [1], [0, 0, 1, 1], [], []>} : vector<4x4xbf16>, vector<4x256xbf16>, vector<4x256xf32> -> vector<4x256xf32>
    %41 = arith.addf %35, %40 : vector<4x256xf32>
    %42 = vector.extract_strided_slice %4 {offsets = [0, 2, 0], sizes = [4, 16, 16], strides = [1, 1, 1]} : vector<4x18x18xbf16> to vector<4x16x16xbf16>
    %43 = vector.shape_cast %42 : vector<4x16x16xbf16> to vector<4x256xbf16>
    %c6 = arith.constant 6 : index
    %c0_24 = arith.constant 0 : index
    %c0_25 = arith.constant 0 : index
    %44 = vector.load %arg8[%c6, %c0_24, %c0_25] : memref<9x4x4xbf16, #tpu.memory_space<vmem>>, vector<1x4x4xbf16>
    %45 = vector.shape_cast %44 : vector<1x4x4xbf16> to vector<4x4xbf16>
    %cst_26 = arith.constant dense<0.000000e+00> : vector<4x256xf32>
    %46 = tpu.matmul %45, %43, %cst_26 {dimension_numbers = #tpu.dot_dimension_numbers<[1], [0], [0], [1], [0, 0, 1, 1], [], []>} : vector<4x4xbf16>, vector<4x256xbf16>, vector<4x256xf32> -> vector<4x256xf32>
    %47 = arith.addf %41, %46 : vector<4x256xf32>
    %48 = vector.extract_strided_slice %4 {offsets = [0, 2, 1], sizes = [4, 16, 16], strides = [1, 1, 1]} : vector<4x18x18xbf16> to vector<4x16x16xbf16>
    %49 = vector.shape_cast %48 : vector<4x16x16xbf16> to vector<4x256xbf16>
    %c7 = arith.constant 7 : index
    %c0_27 = arith.constant 0 : index
    %c0_28 = arith.constant 0 : index
    %50 = vector.load %arg8[%c7, %c0_27, %c0_28] : memref<9x4x4xbf16, #tpu.memory_space<vmem>>, vector<1x4x4xbf16>
    %51 = vector.shape_cast %50 : vector<1x4x4xbf16> to vector<4x4xbf16>
    %cst_29 = arith.constant dense<0.000000e+00> : vector<4x256xf32>
    %52 = tpu.matmul %51, %49, %cst_29 {dimension_numbers = #tpu.dot_dimension_numbers<[1], [0], [0], [1], [0, 0, 1, 1], [], []>} : vector<4x4xbf16>, vector<4x256xbf16>, vector<4x256xf32> -> vector<4x256xf32>
    %53 = arith.addf %47, %52 : vector<4x256xf32>
    %54 = vector.extract_strided_slice %4 {offsets = [0, 2, 2], sizes = [4, 16, 16], strides = [1, 1, 1]} : vector<4x18x18xbf16> to vector<4x16x16xbf16>
    %55 = vector.shape_cast %54 : vector<4x16x16xbf16> to vector<4x256xbf16>
    %c8 = arith.constant 8 : index
    %c0_30 = arith.constant 0 : index
    %c0_31 = arith.constant 0 : index
    %56 = vector.load %arg8[%c8, %c0_30, %c0_31] : memref<9x4x4xbf16, #tpu.memory_space<vmem>>, vector<1x4x4xbf16>
    %57 = vector.shape_cast %56 : vector<1x4x4xbf16> to vector<4x4xbf16>
    %cst_32 = arith.constant dense<0.000000e+00> : vector<4x256xf32>
    %58 = tpu.matmul %57, %55, %cst_32 {dimension_numbers = #tpu.dot_dimension_numbers<[1], [0], [0], [1], [0, 0, 1, 1], [], []>} : vector<4x4xbf16>, vector<4x256xbf16>, vector<4x256xf32> -> vector<4x256xf32>
    %59 = arith.addf %53, %58 : vector<4x256xf32>
    %60 = vector.shape_cast %59 : vector<4x256xf32> to vector<1x4x1x16x16xf32>
    %c0_33 = arith.constant 0 : index
    %c0_34 = arith.constant 0 : index
    %c0_35 = arith.constant 0 : index
    %c0_36 = arith.constant 0 : index
    %c0_37 = arith.constant 0 : index
    %61 = vector.load %arg7[%c0_33, %c0_34, %c0_35, %c0_36, %c0_37] : memref<1x4x1x16x16xf32, #tpu.memory_space<vmem>>, vector<1x4x1x16x16xf32>
    tpu.vector_store %arg7[%c0_33, %c0_34, %c0_35, %c0_36, %c0_37], %60 {strides = array<i32>} : memref<1x4x1x16x16xf32, #tpu.memory_space<vmem>>, vector<1x4x1x16x16xf32>,
    return
  }
  func.func @transform_0(%arg0: i32, %arg1: i32, %arg2: i32, %arg3: i32) -> (i32, i32, i32, i32, i32) {
    %c1_i32 = arith.constant 1 : i32
    %0 = arith.muli %arg2, %c1_i32 : i32
    %1 = arith.addi %0, %arg3 : i32
    %c0_i32 = arith.constant 0 : i32
    %c0_i32_0 = arith.constant 0 : i32
    %c0_i32_1 = arith.constant 0 : i32
    %c0_i32_2 = arith.constant 0 : i32
    return %arg1, %1, %c0_i32, %c0_i32_0, %c0_i32_1 : i32, i32, i32, i32, i32
  }
  func.func @transform_1(%arg0: i32, %arg1: i32, %arg2: i32, %arg3: i32) -> (i32, i32, i32) {
    %c0_i32 = arith.constant 0 : i32
    %c0_i32_0 = arith.constant 0 : i32
    %c0_i32_1 = arith.constant 0 : i32
    return %arg1, %c0_i32, %c0_i32_0 : i32, i32, i32
  }
  func.func @transform_2(%arg0: i32, %arg1: i32, %arg2: i32, %arg3: i32) -> (i32, i32, i32) {
    %c0_i32 = arith.constant 0 : i32
    %c0_i32_0 = arith.constant 0 : i32
    %c0_i32_1 = arith.constant 0 : i32
    return %c0_i32, %arg0, %c0_i32_0 : i32, i32, i32
  }
  func.func @transform_3(%arg0: i32, %arg1: i32, %arg2: i32, %arg3: i32) -> (i32, i32, i32, i32, i32) {
    %c1_i32 = arith.constant 1 : i32
    %0 = arith.muli %arg2, %c1_i32 : i32
    %1 = arith.addi %0, %arg3 : i32
    %c0_i32 = arith.constant 0 : i32
    %c0_i32_0 = arith.constant 0 : i32
    %c0_i32_1 = arith.constant 0 : i32
    return %arg1, %arg0, %1, %c0_i32, %c0_i32_0 : i32, i32, i32, i32, i32
  }
}

</mosaic_0001>

<llo_original>
// kernel: tpu_custom_call.1
$region0: #{tpu_custom_call.1}
  #allocation0 [shape = 'u32[]', space=smem, size = 0x4, offset = 0x4, fixed_abs, tag = 'smem constant byte address 0x4 - core index']
  #allocation1 [shape = 'u32[144,128]{1,0:T(1,128)}', space=vmem, size = 0x12000, scoped, tag = 'internal scratch']
  #allocation2 [shape = 'bf16[9,4,4]{2,1,0:T(4,128)(2,1)}', space=vmem, size = 0x2400, scoped, tag = 'scratch operand']
  %s0 = inlined_call_operand.vmem [shape: bf16[2,1,4,18,18], index: 0, kind: input, shape index: {}]
  %s1 = inlined_call_operand.vmem [shape: f32[2,1,4], index: 1, kind: input, shape index: {}]
  %s2 = inlined_call_operand.vmem [shape: bf16[9,4,4], index: 2, kind: input, shape index: {}]
  %s3 = inlined_call_operand.hbm [shape: f32[2,4,1,16,16], index: 3, kind: output, shape index: {}]
  %s4 = sld [smem:[#allocation0]]
  $region49: #{tpu_custom_call.1} parent=0
    _
  %s6 = ssub.s32 1, %s4
  %s7 = scalar_select 0, %s6, %s4
  $region1: #{tpu_custom_call.1} parent=0
    #allocation3 [shape = 'u8[65536]{0}', space=vmem, size = 0x10000, scoped, tag = 'output window, operand 0']
    #allocation4 [shape = 's32[2]{0}', space=sflag, size = 0x8, scoped, tag = 'scoped memory for tpu_custom_call.1']
    %8 = vsyncpa [#allocation4], 0
    %s9 = scalar_lea.sflag [#allocation4], 1
    %10 = vsyncpa %s9, 0
    loop: start=0, step=1, limit=4
    $region2: #{tpu_custom_call.1} parent=1 // loop_pre_header
      _
    $region3: #{tpu_custom_call.1} parent=1 // loop_header
      %s12 = sphi 0, %s16
      %p13 = scmp.ge.s32.totalorder %s12, 4
      %s19 = sphi 0, %s45
      %s20 = sphi 0, %s41
      %s21 = sphi 0, %s37
      %s22 = sphi 0, %s33
      %s23 = sphi 0, %s19
      %s24 = sphi 0, %s20
      %s25 = sphi 0, %s21
      %s26 = sphi 0, %s22
      %s27 = sphi 0, %s23
      %s28 = sphi 0, %s24
      %s29 = sphi 0, %s25
      %s30 = sphi 0, %s26
      %s52 = sphi 0, %s54
      %s55 = sphi 0, %s52
      %s56 = sphi 0, %s55
      %s72 = sphi 0, %s56
      %s78 = sphi 0, %s80
      %s81 = sphi 0, %s78
      %s82 = sphi 0, %s81
      %s98 = sphi 0, %s82
      %s104 = sphi 0, %s106
      %s107 = sphi 0, %s104
      %s108 = sphi 0, %s107
      %s124 = sphi 0, %s108
      %s136 = sphi 0, %s138
      %s139 = sphi 0, %s136
      %s140 = sphi 0, %s139
      %s156 = sphi 0, %s140
    $region4: #{tpu_custom_call.1} parent=1 // loop_header_branch
      %15 = sbr.rel (%p13) target = $region8
    $region5: #{tpu_custom_call.1} parent=1 // loop_body
      %s17 = ssub.s32 %s12, 1
      %s18 = ssub.s32 %s12, 2
      %s31 = sadd.s32 1, %s22
      %p32 = scmp.ge.s32.totalorder %s31, 1
      %s33 = scalar_select %p32, 0, %s31
      %s34 = sadd.s32 1, %s21
      %s35 = scalar_select %p32, %s34, %s21
      %p36 = scmp.ge.s32.totalorder %s35, 1
      %s37 = scalar_select %p36, 0, %s35
      %s38 = sadd.s32 1, %s20
      %s39 = scalar_select %p36, %s38, %s20
      %p40 = scmp.ge.s32.totalorder %s39, 2
      %s41 = scalar_select %p40, 0, %s39
      %s42 = sadd.s32 1, %s19
      %s43 = scalar_select %p40, %s42, %s19
      %p44 = scmp.ge.s32.totalorder %s43, 1
      %s45 = scalar_select %p44, 0, %s43
      %s46 = sadd.s32 %s21, %s22
      %s47 = sadd.s32 %s37, %s33
      %s48 = ssub.s32 %s20, %s41
      %s49 = ssub.s32 %s46, %s47
      %s50 = sor.u32 %s48, %s49
      %p51 = scmp.eq.s32.totalorder %s50, 0
      %s53 = sadd.s32 %s52, 1
      %s54 = scalar_select %p51, %s52, %s53
      %p57 = pneg %p51
      %p58 = scmp.eq.s32.totalorder %s12, 1
      %p59 = por %p57, %p58
      %p60 = scmp.ne.s32.totalorder %s52, %s55
      %p61 = scmp.eq.s32.totalorder %s12, 0
      %p62 = por %p60, %p61
      %p63 = scmp.ne.s32.totalorder %s52, %s55
      %p64 = scmp.eq.s32.totalorder %s17, 1
      %p65 = por %p63, %p64
      %p66 = scmp.ne.s32.totalorder %s55, %s56
      %p67 = scmp.eq.s32.totalorder %s17, 0
      %p68 = por %p66, %p67
      %p69 = scmp.ne.s32.totalorder %s55, %s56
      %p70 = scmp.eq.s32.totalorder %s18, 1
      %p71 = por %p69, %p70
      %p73 = scmp.ne.s32.totalorder %s56, %s72
      %p74 = scmp.eq.s32.totalorder %s18, 0
      %p75 = por %p73, %p74
      %s76 = ssub.s32 %s20, %s41
      %p77 = scmp.eq.s32.totalorder %s76, 0
      %s79 = sadd.s32 %s78, 1
      %s80 = scalar_select %p77, %s78, %s79
      %p83 = pneg %p77
      %p84 = scmp.eq.s32.totalorder %s12, 1
      %p85 = por %p83, %p84
      %p86 = scmp.ne.s32.totalorder %s78, %s81
      %p87 = scmp.eq.s32.totalorder %s12, 0
      %p88 = por %p86, %p87
      %p89 = scmp.ne.s32.totalorder %s78, %s81
      %p90 = scmp.eq.s32.totalorder %s17, 1
      %p91 = por %p89, %p90
      %p92 = scmp.ne.s32.totalorder %s81, %s82
      %p93 = scmp.eq.s32.totalorder %s17, 0
      %p94 = por %p92, %p93
      %p95 = scmp.ne.s32.totalorder %s81, %s82
      %p96 = scmp.eq.s32.totalorder %s18, 1
      %p97 = por %p95, %p96
      %p99 = scmp.ne.s32.totalorder %s82, %s98
      %p100 = scmp.eq.s32.totalorder %s18, 0
      %p101 = por %p99, %p100
      %s102 = ssub.s32 %s19, %s45
      %p103 = scmp.eq.s32.totalorder %s102, 0
      %s105 = sadd.s32 %s104, 1
      %s106 = scalar_select %p103, %s104, %s105
      %p109 = pneg %p103
      %p110 = scmp.eq.s32.totalorder %s12, 1
      %p111 = por %p109, %p110
      %p112 = scmp.ne.s32.totalorder %s104, %s107
      %p113 = scmp.eq.s32.totalorder %s12, 0
      %p114 = por %p112, %p113
      %p115 = scmp.ne.s32.totalorder %s104, %s107
      %p116 = scmp.eq.s32.totalorder %s17, 1
      %p117 = por %p115, %p116
      %p118 = scmp.ne.s32.totalorder %s107, %s108
      %p119 = scmp.eq.s32.totalorder %s17, 0
      %p120 = por %p118, %p119
      %p121 = scmp.ne.s32.totalorder %s107, %s108
      %p122 = scmp.eq.s32.totalorder %s18, 1
      %p123 = por %p121, %p122
      %p125 = scmp.ne.s32.totalorder %s108, %s124
      %p126 = scmp.eq.s32.totalorder %s18, 0
      %p127 = por %p125, %p126
      %s128 = sadd.s32 %s21, %s22
      %s129 = sadd.s32 %s37, %s33
      %s130 = ssub.s32 %s20, %s41
      %s131 = ssub.s32 %s19, %s45
      %s132 = sor.u32 %s130, %s131
      %s133 = ssub.s32 %s128, %s129
      %s134 = sor.u32 %s132, %s133
      %p135 = scmp.eq.s32.totalorder %s134, 0
      %s137 = sadd.s32 %s136, 1
      %s138 = scalar_select %p135, %s136, %s137
      %p141 = pneg %p135
      %p142 = scmp.eq.s32.totalorder %s12, 1
      %p143 = por %p141, %p142
      %p144 = scmp.ne.s32.totalorder %s136, %s139
      %p145 = scmp.eq.s32.totalorder %s12, 0
      %p146 = por %p144, %p145
      %p147 = scmp.ne.s32.totalorder %s136, %s139
      %p148 = scmp.eq.s32.totalorder %s17, 1
      %p149 = por %p147, %p148
      %p150 = scmp.ne.s32.totalorder %s139, %s140
      %p151 = scmp.eq.s32.totalorder %s17, 0
      %p152 = por %p150, %p151
      %p153 = scmp.ne.s32.totalorder %s139, %s140
      %p154 = scmp.eq.s32.totalorder %s18, 1
      %p155 = por %p153, %p154
      %p157 = scmp.ne.s32.totalorder %s140, %s156
      %p158 = scmp.eq.s32.totalorder %s18, 0
      %p159 = por %p157, %p158
      %p160 = scmp.le.s32.totalorder 1, %s12
      %p161 = scmp.lt.s32.totalorder %s12, 3
      %p162 = pnand %p160, %p161
      %p163 = pneg %p162
      // Predicated region
      $region9: #{tpu_custom_call.1} parent=5 // pred_check
        _
      $region10: #{tpu_custom_call.1} parent=5 // pred_check_branch
        %165 = sbr.rel (%p162) target = $region12
      $region11: #{tpu_custom_call.1} parent=5 // pred_region
        %s166 = ssub.s32 %s12, 1
        // Predicated region
        $region13: #{tpu_custom_call.1} parent=11 // pred_check
          %p167 = pneg %p120
        $region14: #{tpu_custom_call.1} parent=11 // pred_check_branch
          %169 = sbr.rel (%p167) target = $region16
        $region15: #{tpu_custom_call.1} parent=11 // pred_region
          %p170 = scmp.lt.s32.totalorder %s23, 0
          %s171 = scalar_select %p170, %s23, 0
          %s172 = smul.addr %s171, 2
          %s173 = scalar_lea.vmem %s2, %s172
        $region16: #{tpu_custom_call.1} parent=11 // pred_fallthru
          _
      $region12: #{tpu_custom_call.1} parent=5 // pred_fallthru
        _
      %p174 = scmp.lt.s32.totalorder %s12, 2
      // Predicated region
      $region17: #{tpu_custom_call.1} parent=5 // pred_check
        %p175 = pneg %p174
      $region18: #{tpu_custom_call.1} parent=5 // pred_check_branch
        %177 = sbr.rel (%p175) target = $region20
      $region19: #{tpu_custom_call.1} parent=5 // pred_region
        // Predicated region
        $region21: #{tpu_custom_call.1} parent=19 // pred_check
          %p178 = pneg %p62
        $region22: #{tpu_custom_call.1} parent=19 // pred_check_branch
          %180 = sbr.rel (%p178) target = $region24
        $region23: #{tpu_custom_call.1} parent=19 // pred_region
          %s181 = sadd.s32 %s21, %s22
          %p182 = scmp.lt.s32.totalorder %s20, 1
          %s183 = scalar_select %p182, %s20, 1
          %p184 = scmp.lt.s32.totalorder %s181, 0
          %s185 = scalar_select %p184, %s181, 0
          %s186 = smul.addr %s185, 12
          %s187 = smul.addr %s183, 12
          %s188 = sadd.s32 %s186, %s187
          %s189 = smul.addr %s188, 4
          %s190 = scalar_lea.vmem %s0, %s189
          %s191 = sadd.s32 %s21, %s22
        $region24: #{tpu_custom_call.1} parent=19 // pred_fallthru
          _
        // Predicated region
        $region25: #{tpu_custom_call.1} parent=19 // pred_check
          %p192 = pneg %p88
        $region26: #{tpu_custom_call.1} parent=19 // pred_check_branch
          %194 = sbr.rel (%p192) target = $region28
        $region27: #{tpu_custom_call.1} parent=19 // pred_region
          %p195 = scmp.lt.s32.totalorder %s20, 1
          %s196 = scalar_select %p195, %s20, 1
          %s197 = scalar_lea.vmem %s1, %s196
        $region28: #{tpu_custom_call.1} parent=19 // pred_fallthru
          _
      $region20: #{tpu_custom_call.1} parent=5 // pred_fallthru
        _
      %p198 = scmp.le.s32.totalorder 1, %s12
      %p199 = scmp.lt.s32.totalorder %s12, 3
      %p200 = pnand %p198, %p199
      %p201 = pneg %p200
      // Predicated region
      $region29: #{tpu_custom_call.1} parent=5 // pred_check
        _
      $region30: #{tpu_custom_call.1} parent=5 // pred_check_branch
        %203 = sbr.rel (%p200) target = $region32
      $region31: #{tpu_custom_call.1} parent=5 // pred_region
        %s204 = ssub.s32 %s12, 1
        %s205 = sadd.s32 %s25, %s26
        %p206 = scmp.lt.s32.totalorder %s24, 1
        %s207 = scalar_select %p206, %s24, 1
        %p208 = scmp.lt.s32.totalorder %s205, 0
        %s209 = scalar_select %p208, %s205, 0
        %s210 = smul.addr %s209, 12
        %s211 = smul.addr %s207, 12
        %s212 = sadd.s32 %s210, %s211
        %s213 = smul.addr %s212, 4
        %s214 = scalar_lea.vmem %s0, %s213
        %p215 = pneg %p68
        %p216 = pneg %p65
        %p217 = scmp.lt.s32.totalorder %s24, 1
        %s218 = scalar_select %p217, %s24, 1
        %s219 = scalar_lea.vmem %s1, %s218
        %p220 = pneg %p94
        %p221 = pneg %p91
        %p222 = scmp.lt.s32.totalorder %s23, 0
        %s223 = scalar_select %p222, %s23, 0
        %s224 = smul.addr %s223, 2
        %s225 = scalar_lea.vmem %s2, %s224
        %p226 = pneg %p120
        %p227 = pneg %p117
        %p228 = pneg %p152
        %p229 = pneg %p149
        %s230 = sand.u32 %s139, 1
        %s231 = scalar_lea.sflag [#allocation4], %s230
        %s232 = sand.u32 %s139, 1
        %s233 = smul.addr %s232, 64
        %s234 = scalar_lea.vmem [#allocation3], %s233
        %s235 = sadd.s32 %s25, %s26
        %p236 = scmp.lt.s32.totalorder %s24, 1
        %s237 = scalar_select %p236, %s24, 1
        %p238 = scmp.lt.s32.totalorder %s235, 0
        %s239 = scalar_select %p238, %s235, 0
        %s240 = smul.addr %s239, 12
        %s241 = smul.addr %s237, 12
        %s242 = sadd.s32 %s240, %s241
        %s243 = smul.addr %s242, 4
        %s244 = scalar_lea.vmem %s0, %s243
        %s245 = sadd.s32 %s25, %s26
        %p246 = scmp.lt.s32.totalorder %s24, 1
        %s247 = scalar_select %p246, %s24, 1
        %s248 = scalar_lea.vmem %s1, %s247
        %p249 = scmp.lt.s32.totalorder %s23, 0
        %s250 = scalar_select %p249, %s23, 0
        %s251 = smul.addr %s250, 2
        %s252 = scalar_lea.vmem %s2, %s251
        %s253 = sadd.s32 %s25, %s26
        %s254 = smul.u32 4, %s23
        %p256 = scmp.eq.s32.totalorder %s26, 0
        // Predicated region
        $region33: #{tpu_custom_call.1} parent=31 // pred_check
          %p257 = pneg %p256
        $region34: #{tpu_custom_call.1} parent=31 // pred_check_branch
          %259 = sbr.rel (%p257) target = $region36
        $region35: #{tpu_custom_call.1} parent=31 // pred_region
          %v260 = vld [vmem:[%s248] sm:$0x1]
          %v261 = vmul.f32 %v260, 0.16666667
          %v262 = vld [vmem:[%s252] sm:$0x3]
          %v263 = vld [vmem:[%s252 + $0x2] sm:$0x3]
          %v264 = vld [vmem:[%s252 + $0x4] sm:$0x3]
          %v265 = vld [vmem:[%s252 + $0x6] sm:$0x3]
          %v266 = vld [vmem:[%s252 + $0x8] sm:$0x3]
          %v267 = vld [vmem:[%s252 + $0xa] sm:$0x3]
          %v268 = vld [vmem:[%s252 + $0xc] sm:$0x3]
          %v269 = vld [vmem:[%s252 + $0xe] sm:$0x3]
          %v270 = vld [vmem:[%s252 + $0x10] sm:$0x3]
          %v271 = vunpack.c.l.bf16 %v262
          %v272 = vunpack.c.l.bf16 %v263
          %v273 = vunpack.c.l.bf16 %v264
          %v274 = vunpack.c.l.bf16 %v265
          %v275 = vunpack.c.l.bf16 %v266
          %v276 = vunpack.c.l.bf16 %v267
          %v277 = vunpack.c.l.bf16 %v268
          %v278 = vunpack.c.l.bf16 %v269
          %v279 = vunpack.c.l.bf16 %v270
          %v281 = vlaneseq
          %v282 = vshrl.u32 %v281, 7
          %v283 = vsub.s32 0, %v282
          %v284 = vrot.slane %v261, %v283
          %v286 = vmul.f32 %v271, %v284
          %v287 = vmul.f32 %v272, %v284
          %v288 = vmul.f32 %v273, %v284
          %v289 = vmul.f32 %v274, %v284
          %v290 = vmul.f32 %v275, %v284
          %v291 = vmul.f32 %v276, %v284
          %v292 = vmul.f32 %v277, %v284
          %v293 = vmul.f32 %v278, %v284
          %v294 = vmul.f32 %v279, %v284
          %v295 = vmul.f32 %v286, %v286
          %v296 = vmul.f32 %v287, %v287
          %v297 = vmul.f32 %v288, %v288
          %v298 = vmul.f32 %v289, %v289
          %v299 = vmul.f32 %v290, %v290
          %v300 = vmul.f32 %v291, %v291
          %v301 = vmul.f32 %v292, %v292
          %v302 = vmul.f32 %v293, %v293
          %v303 = vmul.f32 %v294, %v294
          %vm304 = vcmask 27648
          %v305 = vsel %vm304, %v295, 0.0
          %306 = vadd.xlane.f32.xlu0 %v305
          %v307 = vpop.xlane.xlu0 %306
          %v308 = vsel %vm304, %v296, 0.0
          %309 = vadd.xlane.f32.xlu0 %v308
          %v310 = vpop.xlane.xlu0 %309
          %v311 = vsel %vm304, %v297, 0.0
          %312 = vadd.xlane.f32.xlu0 %v311
          %v313 = vpop.xlane.xlu0 %312
          %v314 = vsel %vm304, %v298, 0.0
          %315 = vadd.xlane.f32.xlu0 %v314
          %v316 = vpop.xlane.xlu0 %315
          %v317 = vsel %vm304, %v299, 0.0
          %318 = vadd.xlane.f32.xlu0 %v317
          %v319 = vpop.xlane.xlu0 %318
          %v320 = vsel %vm304, %v300, 0.0
          %321 = vadd.xlane.f32.xlu0 %v320
          %v322 = vpop.xlane.xlu0 %321
          %v323 = vsel %vm304, %v301, 0.0
          %324 = vadd.xlane.f32.xlu0 %v323
          %v325 = vpop.xlane.xlu0 %324
          %v326 = vsel %vm304, %v302, 0.0
          %327 = vadd.xlane.f32.xlu0 %v326
          %v328 = vpop.xlane.xlu0 %327
          %v329 = vsel %vm304, %v303, 0.0
          %330 = vadd.xlane.f32.xlu0 %v329
          %v331 = vpop.xlane.xlu0 %330
          %vm332 = vcmask 1043456
          %v333 = vsel %vm332, %v307, 0.0
          %v334 = vsel %vm332, %v310, 0.0
          %v335 = vadd.f32 %v333, %v334
          %v336 = vsel %vm332, %v313, 0.0
          %v337 = vadd.f32 %v335, %v336
          %v338 = vsel %vm332, %v316, 0.0
          %v339 = vadd.f32 %v337, %v338
          %v340 = vsel %vm332, %v319, 0.0
          %v341 = vadd.f32 %v339, %v340
          %v342 = vsel %vm332, %v322, 0.0
          %v343 = vadd.f32 %v341, %v342
          %v344 = vsel %vm332, %v325, 0.0
          %v345 = vadd.f32 %v343, %v344
          %v346 = vsel %vm332, %v328, 0.0
          %v347 = vadd.f32 %v345, %v346
          %v348 = vsel %vm332, %v331, 0.0
          %v349 = vadd.f32 %v347, %v348
          %v350 = vadd.f32 %v349, 1e-08
          %v351 = vrsqrt.pop %v350
          %v352 = vmul.f32 %v286, %v351
          %v353 = vmul.f32 %v287, %v351
          %v354 = vmul.f32 %v288, %v351
          %v355 = vmul.f32 %v289, %v351
          %v356 = vmul.f32 %v290, %v351
          %v357 = vmul.f32 %v291, %v351
          %v358 = vmul.f32 %v292, %v351
          %v359 = vmul.f32 %v293, %v351
          %v360 = vmul.f32 %v294, %v351
          %v361 = vpack.c.bf16 %v352, %v352
          %v362 = vpack.c.bf16 %v353, %v353
          %v363 = vpack.c.bf16 %v354, %v354
          %v364 = vpack.c.bf16 %v355, %v355
          %v365 = vpack.c.bf16 %v356, %v356
          %v366 = vpack.c.bf16 %v357, %v357
          %v367 = vpack.c.bf16 %v358, %v358
          %v368 = vpack.c.bf16 %v359, %v359
          %v369 = vpack.c.bf16 %v360, %v360
          %vm370 = vcmask 25600
          %371 = vst.msk [vmem:[#allocation2] sm:$0x3] %vm370, %v361
          %372 = vst.msk [vmem:[#allocation2 + $0x2] sm:$0x3] %vm370, %v362
          %373 = vst.msk [vmem:[#allocation2 + $0x4] sm:$0x3] %vm370, %v363
          %374 = vst.msk [vmem:[#allocation2 + $0x6] sm:$0x3] %vm370, %v364
          %375 = vst.msk [vmem:[#allocation2 + $0x8] sm:$0x3] %vm370, %v365
          %376 = vst.msk [vmem:[#allocation2 + $0xa] sm:$0x3] %vm370, %v366
          %377 = vst.msk [vmem:[#allocation2 + $0xc] sm:$0x3] %vm370, %v367
          %378 = vst.msk [vmem:[#allocation2 + $0xe] sm:$0x3] %vm370, %v368
          %379 = vst.msk [vmem:[#allocation2 + $0x10] sm:$0x3] %vm370, %v369
        $region36: #{tpu_custom_call.1} parent=31 // pred_fallthru
          _
        %v380 = vld [vmem:[%s244] sm:$0xf]
        %v381 = vld [vmem:[%s244 + $0x4] sm:$0xf]
        %v382 = vld [vmem:[%s244 + $0x8] sm:$0x1]
        %v383 = vld [vmem:[%s244 + $0xc] sm:$0xf]
        %v384 = vld [vmem:[%s244 + $0x10] sm:$0xf]
        %v385 = vld [vmem:[%s244 + $0x14] sm:$0x1]
        %v386 = vld [vmem:[%s244 + $0x18] sm:$0xf]
        %v387 = vld [vmem:[%s244 + $0x1c] sm:$0xf]
        %v388 = vld [vmem:[%s244 + $0x20] sm:$0x1]
        %v389 = vld [vmem:[%s244 + $0x24] sm:$0xf]
        %v390 = vld [vmem:[%s244 + $0x28] sm:$0xf]
        %v391 = vld [vmem:[%s244 + $0x2c] sm:$0x1]
        %v394 = vpack.i.b16 %v383, %v380
        %v395 = vshrl.u32 %v380, 16
        %v396 = vshrl.u32 %v383, 16
        %v397 = vpack.i.b16 %v396, %v395
        %v400 = vpack.i.b16 %v389, %v386
        %v401 = vshrl.u32 %v386, 16
        %v402 = vshrl.u32 %v389, 16
        %v403 = vpack.i.b16 %v402, %v401
        %v406 = vpack.i.b16 %v384, %v381
        %v407 = vshrl.u32 %v381, 16
        %v408 = vshrl.u32 %v384, 16
        %v409 = vpack.i.b16 %v408, %v407
        %v412 = vpack.i.b16 %v390, %v387
        %v413 = vshrl.u32 %v387, 16
        %v414 = vshrl.u32 %v390, 16
        %v415 = vpack.i.b16 %v414, %v413
        %v418 = vunpack.c.l.s4 1983009808
        %v419 = vunpack.c.0.s8 %v418
        %v420 = vlaneseq
        %v421 = vshrl.u32 %v420, 7
        %v422 = vsub.s32 %v419, %v421
        %v423 = vrot.slane %v394, %v422
        %v426 = vunpack.c.l.s4 1983009808
        %v427 = vunpack.c.0.s8 %v426
        %v428 = vlaneseq
        %v429 = vshrl.u32 %v428, 7
        %v430 = vsub.s32 %v427, %v429
        %v431 = vrot.slane %v400, %v430
        %v432 = vcombine.low %v423, %v431
        %v433 = vcombine.high %v423, %v431
        %v435 = vunpack.c.l.s4 1934713408
        %v436 = vunpack.c.0.s8 %v435
        %v437 = vlaneseq
        %v438 = vshrl.u32 %v437, 7
        %v439 = vsub.s32 %v436, %v438
        %v440 = vrot.slane %v432, %v439
        %v442 = vunpack.c.l.s4 1934713408
        %v443 = vunpack.c.0.s8 %v442
        %v444 = vlaneseq
        %v445 = vshrl.u32 %v444, 7
        %v446 = vsub.s32 %v443, %v445
        %v447 = vrot.slane %v433, %v446
        %v448 = vcombine.high %v440, 0
        %v449 = vcombine.high %v447, 0
        %v452 = vunpack.c.l.s4 1983009808
        %v453 = vunpack.c.0.s8 %v452
        %v454 = vlaneseq
        %v455 = vshrl.u32 %v454, 7
        %v456 = vsub.s32 %v453, %v455
        %v457 = vrot.slane %v397, %v456
        %v460 = vunpack.c.l.s4 1983009808
        %v461 = vunpack.c.0.s8 %v460
        %v462 = vlaneseq
        %v463 = vshrl.u32 %v462, 7
        %v464 = vsub.s32 %v461, %v463
        %v465 = vrot.slane %v403, %v464
        %v466 = vcombine.low %v457, %v465
        %v467 = vcombine.high %v457, %v465
        %v469 = vunpack.c.l.s4 1934713408
        %v470 = vunpack.c.0.s8 %v469
        %v471 = vlaneseq
        %v472 = vshrl.u32 %v471, 7
        %v473 = vsub.s32 %v470, %v472
        %v474 = vrot.slane %v466, %v473
        %v476 = vunpack.c.l.s4 1934713408
        %v477 = vunpack.c.0.s8 %v476
        %v478 = vlaneseq
        %v479 = vshrl.u32 %v478, 7
        %v480 = vsub.s32 %v477, %v479
        %v481 = vrot.slane %v467, %v480
        %v482 = vcombine.high %v474, 0
        %v483 = vcombine.high %v481, 0
        %v486 = vunpack.c.l.s4 1983009808
        %v487 = vunpack.c.0.s8 %v486
        %v488 = vlaneseq
        %v489 = vshrl.u32 %v488, 7
        %v490 = vsub.s32 %v487, %v489
        %v491 = vrot.slane %v406, %v490
        %v494 = vunpack.c.l.s4 1983009808
        %v495 = vunpack.c.0.s8 %v494
        %v496 = vlaneseq
        %v497 = vshrl.u32 %v496, 7
        %v498 = vsub.s32 %v495, %v497
        %v499 = vrot.slane %v412, %v498
        %v500 = vcombine.low %v491, %v499
        %v501 = vcombine.high %v491, %v499
        %v503 = vunpack.c.l.s4 1934713408
        %v504 = vunpack.c.0.s8 %v503
        %v505 = vlaneseq
        %v506 = vshrl.u32 %v505, 7
        %v507 = vsub.s32 %v504, %v506
        %v508 = vrot.slane %v500, %v507
        %v510 = vunpack.c.l.s4 1934713408
        %v511 = vunpack.c.0.s8 %v510
        %v512 = vlaneseq
        %v513 = vshrl.u32 %v512, 7
        %v514 = vsub.s32 %v511, %v513
        %v515 = vrot.slane %v501, %v514
        %v516 = vcombine.high %v508, 0
        %v517 = vcombine.high %v515, 0
        %v520 = vunpack.c.l.s4 1983009808
        %v521 = vunpack.c.0.s8 %v520
        %v522 = vlaneseq
        %v523 = vshrl.u32 %v522, 7
        %v524 = vsub.s32 %v521, %v523
        %v525 = vrot.slane %v409, %v524
        %v528 = vunpack.c.l.s4 1983009808
        %v529 = vunpack.c.0.s8 %v528
        %v530 = vlaneseq
        %v531 = vshrl.u32 %v530, 7
        %v532 = vsub.s32 %v529, %v531
        %v533 = vrot.slane %v415, %v532
        %v534 = vcombine.low %v525, %v533
        %v535 = vcombine.high %v525, %v533
        %v537 = vunpack.c.l.s4 1934713408
        %v538 = vunpack.c.0.s8 %v537
        %v539 = vlaneseq
        %v540 = vshrl.u32 %v539, 7
        %v541 = vsub.s32 %v538, %v540
        %v542 = vrot.slane %v534, %v541
        %v544 = vunpack.c.l.s4 1934713408
        %v545 = vunpack.c.0.s8 %v544
        %v546 = vlaneseq
        %v547 = vshrl.u32 %v546, 7
        %v548 = vsub.s32 %v545, %v547
        %v549 = vrot.slane %v535, %v548
        %v550 = vcombine.high %v542, 0
        %v551 = vcombine.high %v549, 0
        %v553 = vunpack.c.l.b16 %v474
        %v554 = vpack.c.b16 %v553, %v553
        %555 = vrot.lane.b32.xlu0 %v554, 16
        %v556 = vpop.permute.xlu0 %555
        %v558 = vunpack.c.l.b16 %v448
        %v559 = vpack.c.b16 %v558, %v558
        %560 = vrot.lane.b32.xlu0 %v559, 32
        %v561 = vpop.permute.xlu0 %560
        %v563 = vunpack.c.l.b16 %v482
        %v564 = vpack.c.b16 %v563, %v563
        %565 = vrot.lane.b32.xlu0 %v564, 48
        %v566 = vpop.permute.xlu0 %565
        %v568 = vunpack.c.l.b16 %v447
        %v569 = vpack.c.b16 %v568, %v568
        %570 = vrot.lane.b32.xlu0 %v569, 64
        %v571 = vpop.permute.xlu0 %570
        %v573 = vunpack.c.l.b16 %v481
        %v574 = vpack.c.b16 %v573, %v573
        %575 = vrot.lane.b32.xlu0 %v574, 80
        %v576 = vpop.permute.xlu0 %575
        %v578 = vunpack.c.l.b16 %v449
        %v579 = vpack.c.b16 %v578, %v578
        %580 = vrot.lane.b32.xlu0 %v579, 96
        %v581 = vpop.permute.xlu0 %580
        %v583 = vunpack.c.l.b16 %v483
        %v584 = vpack.c.b16 %v583, %v583
        %585 = vrot.lane.b32.xlu0 %v584, 112
        %v586 = vpop.permute.xlu0 %585
        %v588 = vunpack.c.l.b16 %v542
        %v589 = vpack.c.b16 %v588, %v588
        %590 = vrot.lane.b32.xlu0 %v589, 16
        %v591 = vpop.permute.xlu0 %590
        %v593 = vunpack.c.l.b16 %v516
        %v594 = vpack.c.b16 %v593, %v593
        %595 = vrot.lane.b32.xlu0 %v594, 32
        %v596 = vpop.permute.xlu0 %595
        %v598 = vunpack.c.l.b16 %v550
        %v599 = vpack.c.b16 %v598, %v598
        %600 = vrot.lane.b32.xlu0 %v599, 48
        %v601 = vpop.permute.xlu0 %600
        %v603 = vunpack.c.l.b16 %v515
        %v604 = vpack.c.b16 %v603, %v603
        %605 = vrot.lane.b32.xlu0 %v604, 64
        %v606 = vpop.permute.xlu0 %605
        %v608 = vunpack.c.l.b16 %v549
        %v609 = vpack.c.b16 %v608, %v608
        %610 = vrot.lane.b32.xlu0 %v609, 80
        %v611 = vpop.permute.xlu0 %610
        %v613 = vunpack.c.l.b16 %v517
        %v614 = vpack.c.b16 %v613, %v613
        %615 = vrot.lane.b32.xlu0 %v614, 96
        %v616 = vpop.permute.xlu0 %615
        %v618 = vunpack.c.l.b16 %v551
        %v619 = vpack.c.b16 %v618, %v618
        %620 = vrot.lane.b32.xlu0 %v619, 112
        %v621 = vpop.permute.xlu0 %620
        %vm622 = vcmask 130048
        %v625 = vsel %vm622, %v440, %v556
        %vm626 = vcmask 261120
        %v628 = vsel %vm626, %v625, %v561
        %vm629 = vcmask 392192
        %v631 = vsel %vm629, %v628, %v566
        %vm632 = vcmask 523264
        %v634 = vsel %vm632, %v631, %v571
        %vm635 = vcmask 654336
        %v637 = vsel %vm635, %v634, %v576
        %vm638 = vcmask 785408
        %v640 = vsel %vm638, %v637, %v581
        %vm641 = vcmask 916480
        %v643 = vsel %vm641, %v640, %v586
        %v646 = vsel %vm622, %v508, %v591
        %v648 = vsel %vm626, %v646, %v596
        %v650 = vsel %vm629, %v648, %v601
        %v652 = vsel %vm632, %v650, %v606
        %v654 = vsel %vm635, %v652, %v611
        %v656 = vsel %vm638, %v654, %v616
        %v658 = vsel %vm641, %v656, %v621
        %v659 = vld [vmem:[#allocation2] sm:$0x3]
        %668 = vrot.lane.b32.xlu0 %v380, 127
        %v669 = vpop.permute.xlu0 %668
        %670 = vrot.lane.b32.xlu0 %v381, 127
        %v671 = vpop.permute.xlu0 %670
        %672 = vrot.lane.b32.xlu0 %v383, 127
        %v673 = vpop.permute.xlu0 %672
        %674 = vrot.lane.b32.xlu0 %v384, 127
        %v675 = vpop.permute.xlu0 %674
        %676 = vrot.lane.b32.xlu0 %v386, 127
        %v677 = vpop.permute.xlu0 %676
        %678 = vrot.lane.b32.xlu0 %v387, 127
        %v679 = vpop.permute.xlu0 %678
        %680 = vrot.lane.b32.xlu0 %v389, 127
        %v681 = vpop.permute.xlu0 %680
        %682 = vrot.lane.b32.xlu0 %v390, 127
        %v683 = vpop.permute.xlu0 %682
        %v686 = vpack.i.b16 %v673, %v669
        %v687 = vshrl.u32 %v669, 16
        %v688 = vshrl.u32 %v673, 16
        %v689 = vpack.i.b16 %v688, %v687
        %v692 = vpack.i.b16 %v681, %v677
        %v693 = vshrl.u32 %v677, 16
        %v694 = vshrl.u32 %v681, 16
        %v695 = vpack.i.b16 %v694, %v693
        %v698 = vpack.i.b16 %v675, %v671
        %v699 = vshrl.u32 %v671, 16
        %v700 = vshrl.u32 %v675, 16
        %v701 = vpack.i.b16 %v700, %v699
        %v704 = vpack.i.b16 %v683, %v679
        %v705 = vshrl.u32 %v679, 16
        %v706 = vshrl.u32 %v683, 16
        %v707 = vpack.i.b16 %v706, %v705
        %v710 = vunpack.c.l.s4 1983009808
        %v711 = vunpack.c.0.s8 %v710
        %v712 = vlaneseq
        %v713 = vshrl.u32 %v712, 7
        %v714 = vsub.s32 %v711, %v713
        %v715 = vrot.slane %v686, %v714
        %v718 = vunpack.c.l.s4 1983009808
        %v719 = vunpack.c.0.s8 %v718
        %v720 = vlaneseq
        %v721 = vshrl.u32 %v720, 7
        %v722 = vsub.s32 %v719, %v721
        %v723 = vrot.slane %v692, %v722
        %v724 = vcombine.low %v715, %v723
        %v725 = vcombine.high %v715, %v723
        %v727 = vunpack.c.l.s4 1934713408
        %v728 = vunpack.c.0.s8 %v727
        %v729 = vlaneseq
        %v730 = vshrl.u32 %v729, 7
        %v731 = vsub.s32 %v728, %v730
        %v732 = vrot.slane %v724, %v731
        %v734 = vunpack.c.l.s4 1934713408
        %v735 = vunpack.c.0.s8 %v734
        %v736 = vlaneseq
        %v737 = vshrl.u32 %v736, 7
        %v738 = vsub.s32 %v735, %v737
        %v739 = vrot.slane %v725, %v738
        %v740 = vcombine.high %v732, 0
        %v741 = vcombine.high %v739, 0
        %v744 = vunpack.c.l.s4 1983009808
        %v745 = vunpack.c.0.s8 %v744
        %v746 = vlaneseq
        %v747 = vshrl.u32 %v746, 7
        %v748 = vsub.s32 %v745, %v747
        %v749 = vrot.slane %v689, %v748
        %v752 = vunpack.c.l.s4 1983009808
        %v753 = vunpack.c.0.s8 %v752
        %v754 = vlaneseq
        %v755 = vshrl.u32 %v754, 7
        %v756 = vsub.s32 %v753, %v755
        %v757 = vrot.slane %v695, %v756
        %v758 = vcombine.low %v749, %v757
        %v759 = vcombine.high %v749, %v757
        %v761 = vunpack.c.l.s4 1934713408
        %v762 = vunpack.c.0.s8 %v761
        %v763 = vlaneseq
        %v764 = vshrl.u32 %v763, 7
        %v765 = vsub.s32 %v762, %v764
        %v766 = vrot.slane %v758, %v765
        %v768 = vunpack.c.l.s4 1934713408
        %v769 = vunpack.c.0.s8 %v768
        %v770 = vlaneseq
        %v771 = vshrl.u32 %v770, 7
        %v772 = vsub.s32 %v769, %v771
        %v773 = vrot.slane %v759, %v772
        %v774 = vcombine.high %v766, 0
        %v775 = vcombine.high %v773, 0
        %v778 = vunpack.c.l.s4 1983009808
        %v779 = vunpack.c.0.s8 %v778
        %v780 = vlaneseq
        %v781 = vshrl.u32 %v780, 7
        %v782 = vsub.s32 %v779, %v781
        %v783 = vrot.slane %v698, %v782
        %v786 = vunpack.c.l.s4 1983009808
        %v787 = vunpack.c.0.s8 %v786
        %v788 = vlaneseq
        %v789 = vshrl.u32 %v788, 7
        %v790 = vsub.s32 %v787, %v789
        %v791 = vrot.slane %v704, %v790
        %v792 = vcombine.low %v783, %v791
        %v793 = vcombine.high %v783, %v791
        %v795 = vunpack.c.l.s4 1934713408
        %v796 = vunpack.c.0.s8 %v795
        %v797 = vlaneseq
        %v798 = vshrl.u32 %v797, 7
        %v799 = vsub.s32 %v796, %v798
        %v800 = vrot.slane %v792, %v799
        %v802 = vunpack.c.l.s4 1934713408
        %v803 = vunpack.c.0.s8 %v802
        %v804 = vlaneseq
        %v805 = vshrl.u32 %v804, 7
        %v806 = vsub.s32 %v803, %v805
        %v807 = vrot.slane %v793, %v806
        %v808 = vcombine.high %v800, 0
        %v809 = vcombine.high %v807, 0
        %v812 = vunpack.c.l.s4 1983009808
        %v813 = vunpack.c.0.s8 %v812
        %v814 = vlaneseq
        %v815 = vshrl.u32 %v814, 7
        %v816 = vsub.s32 %v813, %v815
        %v817 = vrot.slane %v701, %v816
        %v820 = vunpack.c.l.s4 1983009808
        %v821 = vunpack.c.0.s8 %v820
        %v822 = vlaneseq
        %v823 = vshrl.u32 %v822, 7
        %v824 = vsub.s32 %v821, %v823
        %v825 = vrot.slane %v707, %v824
        %v826 = vcombine.low %v817, %v825
        %v827 = vcombine.high %v817, %v825
        %v829 = vunpack.c.l.s4 1934713408
        %v830 = vunpack.c.0.s8 %v829
        %v831 = vlaneseq
        %v832 = vshrl.u32 %v831, 7
        %v833 = vsub.s32 %v830, %v832
        %v834 = vrot.slane %v826, %v833
        %v836 = vunpack.c.l.s4 1934713408
        %v837 = vunpack.c.0.s8 %v836
        %v838 = vlaneseq
        %v839 = vshrl.u32 %v838, 7
        %v840 = vsub.s32 %v837, %v839
        %v841 = vrot.slane %v827, %v840
        %v842 = vcombine.high %v834, 0
        %v843 = vcombine.high %v841, 0
        %v845 = vunpack.c.l.b16 %v766
        %v846 = vpack.c.b16 %v845, %v845
        %847 = vrot.lane.b32.xlu0 %v846, 16
        %v848 = vpop.permute.xlu0 %847
        %v850 = vunpack.c.l.b16 %v740
        %v851 = vpack.c.b16 %v850, %v850
        %852 = vrot.lane.b32.xlu0 %v851, 32
        %v853 = vpop.permute.xlu0 %852
        %v855 = vunpack.c.l.b16 %v774
        %v856 = vpack.c.b16 %v855, %v855
        %857 = vrot.lane.b32.xlu0 %v856, 48
        %v858 = vpop.permute.xlu0 %857
        %v860 = vunpack.c.l.b16 %v739
        %v861 = vpack.c.b16 %v860, %v860
        %862 = vrot.lane.b32.xlu0 %v861, 64
        %v863 = vpop.permute.xlu0 %862
        %v865 = vunpack.c.l.b16 %v773
        %v866 = vpack.c.b16 %v865, %v865
        %867 = vrot.lane.b32.xlu0 %v866, 80
        %v868 = vpop.permute.xlu0 %867
        %v870 = vunpack.c.l.b16 %v741
        %v871 = vpack.c.b16 %v870, %v870
        %872 = vrot.lane.b32.xlu0 %v871, 96
        %v873 = vpop.permute.xlu0 %872
        %v875 = vunpack.c.l.b16 %v775
        %v876 = vpack.c.b16 %v875, %v875
        %877 = vrot.lane.b32.xlu0 %v876, 112
        %v878 = vpop.permute.xlu0 %877
        %v880 = vunpack.c.l.b16 %v834
        %v881 = vpack.c.b16 %v880, %v880
        %882 = vrot.lane.b32.xlu0 %v881, 16
        %v883 = vpop.permute.xlu0 %882
        %v885 = vunpack.c.l.b16 %v808
        %v886 = vpack.c.b16 %v885, %v885
        %887 = vrot.lane.b32.xlu0 %v886, 32
        %v888 = vpop.permute.xlu0 %887
        %v890 = vunpack.c.l.b16 %v842
        %v891 = vpack.c.b16 %v890, %v890
        %892 = vrot.lane.b32.xlu0 %v891, 48
        %v893 = vpop.permute.xlu0 %892
        %v895 = vunpack.c.l.b16 %v807
        %v896 = vpack.c.b16 %v895, %v895
        %897 = vrot.lane.b32.xlu0 %v896, 64
        %v898 = vpop.permute.xlu0 %897
        %v900 = vunpack.c.l.b16 %v841
        %v901 = vpack.c.b16 %v900, %v900
        %902 = vrot.lane.b32.xlu0 %v901, 80
        %v903 = vpop.permute.xlu0 %902
        %v905 = vunpack.c.l.b16 %v809
        %v906 = vpack.c.b16 %v905, %v905
        %907 = vrot.lane.b32.xlu0 %v906, 96
        %v908 = vpop.permute.xlu0 %907
        %v910 = vunpack.c.l.b16 %v843
        %v911 = vpack.c.b16 %v910, %v910
        %912 = vrot.lane.b32.xlu0 %v911, 112
        %v913 = vpop.permute.xlu0 %912
        %v916 = vsel %vm622, %v732, %v848
        %v918 = vsel %vm626, %v916, %v853
        %v920 = vsel %vm629, %v918, %v858
        %v922 = vsel %vm632, %v920, %v863
        %v924 = vsel %vm635, %v922, %v868
        %v926 = vsel %vm638, %v924, %v873
        %v928 = vsel %vm641, %v926, %v878
        %v931 = vsel %vm622, %v800, %v883
        %v933 = vsel %vm626, %v931, %v888
        %v935 = vsel %vm629, %v933, %v893
        %v937 = vsel %vm632, %v935, %v898
        %v939 = vsel %vm635, %v937, %v903
        %v941 = vsel %vm638, %v939, %v908
        %v943 = vsel %vm641, %v941, %v913
        %s944 = scalar_lea.vmem [#allocation2], 2
        %v945 = vld [vmem:[%s944] sm:$0x3]
        %vm946 = vcmask 31744
        %v948 = vsel %vm946, %v945, 0
        %vm950 = vcmask 1041408
        %v951 = vsel %vm950, %v928, 0
        %v953 = vsel %vm950, %v943, 0
        %955 = vmatprep.subr.bf16.mxu0 0
        %956 = vmatpush1.bf16.msra.mxu0 0
        %957 = vmatprep.subr.bf16.mxu0 0
        %958 = vmatpush1.bf16.msra.mxu0 0
        %959 = vmatprep.subr.bf16.mxu0 0
        %960 = vmatpush1.bf16.msra.mxu0 0
        %961 = vmatprep.subr.bf16.mxu0 0
        %962 = vmatpush1.bf16.msra.mxu0 0
        %963 = vmatprep.subr.bf16.mxu0 0
        %964 = vmatpush1.bf16.msra.mxu0 0
        %965 = vmatprep.subr.bf16.mxu0 0
        %966 = vmatpush1.bf16.msra.mxu0 0
        %967 = vmatprep.subr.bf16.mxu0 0
        %968 = vmatpush1.bf16.msra.mxu0 0
        %969 = vmatprep.subr.bf16.mxu0 %v953
        %970 = vmatpush1.bf16.msra.mxu0 %v951
        %971 = vmatprep.subr.bf16.mxu0 0
        %972 = vmatpush2.bf16.msra.mxu0 0
        %973 = vmatprep.subr.bf16.mxu0 0
        %974 = vmatpush2.bf16.msra.mxu0 0
        %975 = vmatprep.subr.bf16.mxu0 0
        %976 = vmatpush2.bf16.msra.mxu0 0
        %977 = vmatprep.subr.bf16.mxu0 0
        %978 = vmatpush2.bf16.msra.mxu0 0
        %979 = vmatprep.subr.bf16.mxu0 0
        %980 = vmatpush2.bf16.msra.mxu0 0
        %981 = vmatprep.subr.bf16.mxu0 0
        %982 = vmatpush2.bf16.msra.mxu0 0
        %983 = vmatprep.subr.bf16.mxu0 0
        %984 = vmatpush2.bf16.msra.mxu0 0
        %985 = vmatprep.subr.bf16.mxu0 0
        %986 = vmatpush2.bf16.msra.mxu0 0
        %987 = vmatprep.mubr.bf16.mxu0 0
        %988 = vmatmul.mubr.bf16.gmra.mxu0 %v948
        %v989 = vpop.f32.mrf.mxu0
        %v990 = vadd.f32 0.0, %v989
        %v991 = vpop.f32.mrf.mxu0
        %v992 = vadd.f32 0.0, %v991
        %v993 = vpop.f32.mrf.mxu0
        %v994 = vpop.f32.mrf.mxu0
        %995 = vdwg.mxu0
        %v997 = vsel %vm946, %v659, 0
        %v999 = vsel %vm950, %v643, 0
        %v1001 = vsel %vm950, %v658, 0
        %1003 = vmatprep.subr.bf16.mxu0 0
        %1004 = vmatpush1.bf16.msra.mxu0 0
        %1005 = vmatprep.subr.bf16.mxu0 0
        %1006 = vmatpush1.bf16.msra.mxu0 0
        %1007 = vmatprep.subr.bf16.mxu0 0
        %1008 = vmatpush1.bf16.msra.mxu0 0
        %1009 = vmatprep.subr.bf16.mxu0 0
        %1010 = vmatpush1.bf16.msra.mxu0 0
        %1011 = vmatprep.subr.bf16.mxu0 0
        %1012 = vmatpush1.bf16.msra.mxu0 0
        %1013 = vmatprep.subr.bf16.mxu0 0
        %1014 = vmatpush1.bf16.msra.mxu0 0
        %1015 = vmatprep.subr.bf16.mxu0 0
        %1016 = vmatpush1.bf16.msra.mxu0 0
        %1017 = vmatprep.subr.bf16.mxu0 %v1001
        %1018 = vmatpush1.bf16.msra.mxu0 %v999
        %1019 = vmatprep.subr.bf16.mxu0 0
        %1020 = vmatpush2.bf16.msra.mxu0 0
        %1021 = vmatprep.subr.bf16.mxu0 0
        %1022 = vmatpush2.bf16.msra.mxu0 0
        %1023 = vmatprep.subr.bf16.mxu0 0
        %1024 = vmatpush2.bf16.msra.mxu0 0
        %1025 = vmatprep.subr.bf16.mxu0 0
        %1026 = vmatpush2.bf16.msra.mxu0 0
        %1027 = vmatprep.subr.bf16.mxu0 0
        %1028 = vmatpush2.bf16.msra.mxu0 0
        %1029 = vmatprep.subr.bf16.mxu0 0
        %1030 = vmatpush2.bf16.msra.mxu0 0
        %1031 = vmatprep.subr.bf16.mxu0 0
        %1032 = vmatpush2.bf16.msra.mxu0 0
        %1033 = vmatprep.subr.bf16.mxu0 0
        %1034 = vmatpush2.bf16.msra.mxu0 0
        %1035 = vmatprep.mubr.bf16.mxu0 0
        %1036 = vmatmul.mubr.bf16.gmra.mxu0 %v997
        %v1037 = vpop.f32.mrf.mxu0
        %v1038 = vadd.f32 %v990, %v1037
        %v1039 = vpop.f32.mrf.mxu0
        %v1040 = vadd.f32 %v992, %v1039
        %v1041 = vpop.f32.mrf.mxu0
        %v1042 = vpop.f32.mrf.mxu0
        %1043 = vdwg.mxu0
        %1044 = vrot.lane.b32.xlu0 %v380, 126
        %v1045 = vpop.permute.xlu0 %1044
        %1046 = vrot.lane.b32.xlu0 %v381, 126
        %v1047 = vpop.permute.xlu0 %1046
        %1048 = vrot.lane.b32.xlu0 %v383, 126
        %v1049 = vpop.permute.xlu0 %1048
        %1050 = vrot.lane.b32.xlu0 %v384, 126
        %v1051 = vpop.permute.xlu0 %1050
        %1052 = vrot.lane.b32.xlu0 %v386, 126
        %v1053 = vpop.permute.xlu0 %1052
        %1054 = vrot.lane.b32.xlu0 %v387, 126
        %v1055 = vpop.permute.xlu0 %1054
        %1056 = vrot.lane.b32.xlu0 %v389, 126
        %v1057 = vpop.permute.xlu0 %1056
        %1058 = vrot.lane.b32.xlu0 %v390, 126
        %v1059 = vpop.permute.xlu0 %1058
        %v1062 = vpack.i.b16 %v1049, %v1045
        %v1063 = vshrl.u32 %v1045, 16
        %v1064 = vshrl.u32 %v1049, 16
        %v1065 = vpack.i.b16 %v1064, %v1063
        %v1068 = vpack.i.b16 %v1057, %v1053
        %v1069 = vshrl.u32 %v1053, 16
        %v1070 = vshrl.u32 %v1057, 16
        %v1071 = vpack.i.b16 %v1070, %v1069
        %v1074 = vpack.i.b16 %v1051, %v1047
        %v1075 = vshrl.u32 %v1047, 16
        %v1076 = vshrl.u32 %v1051, 16
        %v1077 = vpack.i.b16 %v1076, %v1075
        %v1080 = vpack.i.b16 %v1059, %v1055
        %v1081 = vshrl.u32 %v1055, 16
        %v1082 = vshrl.u32 %v1059, 16
        %v1083 = vpack.i.b16 %v1082, %v1081
        %v1086 = vunpack.c.l.s4 1983009808
        %v1087 = vunpack.c.0.s8 %v1086
        %v1088 = vlaneseq
        %v1089 = vshrl.u32 %v1088, 7
        %v1090 = vsub.s32 %v1087, %v1089
        %v1091 = vrot.slane %v1062, %v1090
        %v1094 = vunpack.c.l.s4 1983009808
        %v1095 = vunpack.c.0.s8 %v1094
        %v1096 = vlaneseq
        %v1097 = vshrl.u32 %v1096, 7
        %v1098 = vsub.s32 %v1095, %v1097
        %v1099 = vrot.slane %v1068, %v1098
        %v1100 = vcombine.low %v1091, %v1099
        %v1101 = vcombine.high %v1091, %v1099
        %v1103 = vunpack.c.l.s4 1934713408
        %v1104 = vunpack.c.0.s8 %v1103
        %v1105 = vlaneseq
        %v1106 = vshrl.u32 %v1105, 7
        %v1107 = vsub.s32 %v1104, %v1106
        %v1108 = vrot.slane %v1100, %v1107
        %v1110 = vunpack.c.l.s4 1934713408
        %v1111 = vunpack.c.0.s8 %v1110
        %v1112 = vlaneseq
        %v1113 = vshrl.u32 %v1112, 7
        %v1114 = vsub.s32 %v1111, %v1113
        %v1115 = vrot.slane %v1101, %v1114
        %v1116 = vcombine.high %v1108, 0
        %v1117 = vcombine.high %v1115, 0
        %v1120 = vunpack.c.l.s4 1983009808
        %v1121 = vunpack.c.0.s8 %v1120
        %v1122 = vlaneseq
        %v1123 = vshrl.u32 %v1122, 7
        %v1124 = vsub.s32 %v1121, %v1123
        %v1125 = vrot.slane %v1065, %v1124
        %v1128 = vunpack.c.l.s4 1983009808
        %v1129 = vunpack.c.0.s8 %v1128
        %v1130 = vlaneseq
        %v1131 = vshrl.u32 %v1130, 7
        %v1132 = vsub.s32 %v1129, %v1131
        %v1133 = vrot.slane %v1071, %v1132
        %v1134 = vcombine.low %v1125, %v1133
        %v1135 = vcombine.high %v1125, %v1133
        %v1137 = vunpack.c.l.s4 1934713408
        %v1138 = vunpack.c.0.s8 %v1137
        %v1139 = vlaneseq
        %v1140 = vshrl.u32 %v1139, 7
        %v1141 = vsub.s32 %v1138, %v1140
        %v1142 = vrot.slane %v1134, %v1141
        %v1144 = vunpack.c.l.s4 1934713408
        %v1145 = vunpack.c.0.s8 %v1144
        %v1146 = vlaneseq
        %v1147 = vshrl.u32 %v1146, 7
        %v1148 = vsub.s32 %v1145, %v1147
        %v1149 = vrot.slane %v1135, %v1148
        %v1150 = vcombine.high %v1142, 0
        %v1151 = vcombine.high %v1149, 0
        %v1154 = vunpack.c.l.s4 1983009808
        %v1155 = vunpack.c.0.s8 %v1154
        %v1156 = vlaneseq
        %v1157 = vshrl.u32 %v1156, 7
        %v1158 = vsub.s32 %v1155, %v1157
        %v1159 = vrot.slane %v1074, %v1158
        %v1162 = vunpack.c.l.s4 1983009808
        %v1163 = vunpack.c.0.s8 %v1162
        %v1164 = vlaneseq
        %v1165 = vshrl.u32 %v1164, 7
        %v1166 = vsub.s32 %v1163, %v1165
        %v1167 = vrot.slane %v1080, %v1166
        %v1168 = vcombine.low %v1159, %v1167
        %v1169 = vcombine.high %v1159, %v1167
        %v1171 = vunpack.c.l.s4 1934713408
        %v1172 = vunpack.c.0.s8 %v1171
        %v1173 = vlaneseq
        %v1174 = vshrl.u32 %v1173, 7
        %v1175 = vsub.s32 %v1172, %v1174
        %v1176 = vrot.slane %v1168, %v1175
        %v1178 = vunpack.c.l.s4 1934713408
        %v1179 = vunpack.c.0.s8 %v1178
        %v1180 = vlaneseq
        %v1181 = vshrl.u32 %v1180, 7
        %v1182 = vsub.s32 %v1179, %v1181
        %v1183 = vrot.slane %v1169, %v1182
        %v1184 = vcombine.high %v1176, 0
        %v1185 = vcombine.high %v1183, 0
        %v1188 = vunpack.c.l.s4 1983009808
        %v1189 = vunpack.c.0.s8 %v1188
        %v1190 = vlaneseq
        %v1191 = vshrl.u32 %v1190, 7
        %v1192 = vsub.s32 %v1189, %v1191
        %v1193 = vrot.slane %v1077, %v1192
        %v1196 = vunpack.c.l.s4 1983009808
        %v1197 = vunpack.c.0.s8 %v1196
        %v1198 = vlaneseq
        %v1199 = vshrl.u32 %v1198, 7
        %v1200 = vsub.s32 %v1197, %v1199
        %v1201 = vrot.slane %v1083, %v1200
        %v1202 = vcombine.low %v1193, %v1201
        %v1203 = vcombine.high %v1193, %v1201
        %v1205 = vunpack.c.l.s4 1934713408
        %v1206 = vunpack.c.0.s8 %v1205
        %v1207 = vlaneseq
        %v1208 = vshrl.u32 %v1207, 7
        %v1209 = vsub.s32 %v1206, %v1208
        %v1210 = vrot.slane %v1202, %v1209
        %v1212 = vunpack.c.l.s4 1934713408
        %v1213 = vunpack.c.0.s8 %v1212
        %v1214 = vlaneseq
        %v1215 = vshrl.u32 %v1214, 7
        %v1216 = vsub.s32 %v1213, %v1215
        %v1217 = vrot.slane %v1203, %v1216
        %v1218 = vcombine.high %v1210, 0
        %v1219 = vcombine.high %v1217, 0
        %v1221 = vunpack.c.l.b16 %v1142
        %v1222 = vpack.c.b16 %v1221, %v1221
        %1223 = vrot.lane.b32.xlu0 %v1222, 16
        %v1224 = vpop.permute.xlu0 %1223
        %v1226 = vunpack.c.l.b16 %v1116
        %v1227 = vpack.c.b16 %v1226, %v1226
        %1228 = vrot.lane.b32.xlu0 %v1227, 32
        %v1229 = vpop.permute.xlu0 %1228
        %v1231 = vunpack.c.l.b16 %v1150
        %v1232 = vpack.c.b16 %v1231, %v1231
        %1233 = vrot.lane.b32.xlu0 %v1232, 48
        %v1234 = vpop.permute.xlu0 %1233
        %v1236 = vunpack.c.l.b16 %v1115
        %v1237 = vpack.c.b16 %v1236, %v1236
        %1238 = vrot.lane.b32.xlu0 %v1237, 64
        %v1239 = vpop.permute.xlu0 %1238
        %v1241 = vunpack.c.l.b16 %v1149
        %v1242 = vpack.c.b16 %v1241, %v1241
        %1243 = vrot.lane.b32.xlu0 %v1242, 80
        %v1244 = vpop.permute.xlu0 %1243
        %v1246 = vunpack.c.l.b16 %v1117
        %v1247 = vpack.c.b16 %v1246, %v1246
        %1248 = vrot.lane.b32.xlu0 %v1247, 96
        %v1249 = vpop.permute.xlu0 %1248
        %v1251 = vunpack.c.l.b16 %v1151
        %v1252 = vpack.c.b16 %v1251, %v1251
        %1253 = vrot.lane.b32.xlu0 %v1252, 112
        %v1254 = vpop.permute.xlu0 %1253
        %v1256 = vunpack.c.l.b16 %v1210
        %v1257 = vpack.c.b16 %v1256, %v1256
        %1258 = vrot.lane.b32.xlu0 %v1257, 16
        %v1259 = vpop.permute.xlu0 %1258
        %v1261 = vunpack.c.l.b16 %v1184
        %v1262 = vpack.c.b16 %v1261, %v1261
        %1263 = vrot.lane.b32.xlu0 %v1262, 32
        %v1264 = vpop.permute.xlu0 %1263
        %v1266 = vunpack.c.l.b16 %v1218
        %v1267 = vpack.c.b16 %v1266, %v1266
        %1268 = vrot.lane.b32.xlu0 %v1267, 48
        %v1269 = vpop.permute.xlu0 %1268
        %v1271 = vunpack.c.l.b16 %v1183
        %v1272 = vpack.c.b16 %v1271, %v1271
        %1273 = vrot.lane.b32.xlu0 %v1272, 64
        %v1274 = vpop.permute.xlu0 %1273
        %v1276 = vunpack.c.l.b16 %v1217
        %v1277 = vpack.c.b16 %v1276, %v1276
        %1278 = vrot.lane.b32.xlu0 %v1277, 80
        %v1279 = vpop.permute.xlu0 %1278
        %v1281 = vunpack.c.l.b16 %v1185
        %v1282 = vpack.c.b16 %v1281, %v1281
        %1283 = vrot.lane.b32.xlu0 %v1282, 96
        %v1284 = vpop.permute.xlu0 %1283
        %v1286 = vunpack.c.l.b16 %v1219
        %v1287 = vpack.c.b16 %v1286, %v1286
        %1288 = vrot.lane.b32.xlu0 %v1287, 112
        %v1289 = vpop.permute.xlu0 %1288
        %v1292 = vsel %vm622, %v1108, %v1224
        %v1294 = vsel %vm626, %v1292, %v1229
        %v1296 = vsel %vm629, %v1294, %v1234
        %v1298 = vsel %vm632, %v1296, %v1239
        %v1300 = vsel %vm635, %v1298, %v1244
        %v1302 = vsel %vm638, %v1300, %v1249
        %v1304 = vsel %vm641, %v1302, %v1254
        %v1307 = vsel %vm622, %v1176, %v1259
        %v1309 = vsel %vm626, %v1307, %v1264
        %v1311 = vsel %vm629, %v1309, %v1269
        %v1313 = vsel %vm632, %v1311, %v1274
        %v1315 = vsel %vm635, %v1313, %v1279
        %v1317 = vsel %vm638, %v1315, %v1284
        %v1319 = vsel %vm641, %v1317, %v1289
        %s1320 = scalar_lea.vmem [#allocation2], 4
        %v1321 = vld [vmem:[%s1320] sm:$0x3]
        %v1323 = vsel %vm946, %v1321, 0
        %v1325 = vsel %vm950, %v1304, 0
        %v1327 = vsel %vm950, %v1319, 0
        %1329 = vmatprep.subr.bf16.mxu0 0
        %1330 = vmatpush1.bf16.msra.mxu0 0
        %1331 = vmatprep.subr.bf16.mxu0 0
        %1332 = vmatpush1.bf16.msra.mxu0 0
        %1333 = vmatprep.subr.bf16.mxu0 0
        %1334 = vmatpush1.bf16.msra.mxu0 0
        %1335 = vmatprep.subr.bf16.mxu0 0
        %1336 = vmatpush1.bf16.msra.mxu0 0
        %1337 = vmatprep.subr.bf16.mxu0 0
        %1338 = vmatpush1.bf16.msra.mxu0 0
        %1339 = vmatprep.subr.bf16.mxu0 0
        %1340 = vmatpush1.bf16.msra.mxu0 0
        %1341 = vmatprep.subr.bf16.mxu0 0
        %1342 = vmatpush1.bf16.msra.mxu0 0
        %1343 = vmatprep.subr.bf16.mxu0 %v1327
        %1344 = vmatpush1.bf16.msra.mxu0 %v1325
        %1345 = vmatprep.subr.bf16.mxu0 0
        %1346 = vmatpush2.bf16.msra.mxu0 0
        %1347 = vmatprep.subr.bf16.mxu0 0
        %1348 = vmatpush2.bf16.msra.mxu0 0
        %1349 = vmatprep.subr.bf16.mxu0 0
        %1350 = vmatpush2.bf16.msra.mxu0 0
        %1351 = vmatprep.subr.bf16.mxu0 0
        %1352 = vmatpush2.bf16.msra.mxu0 0
        %1353 = vmatprep.subr.bf16.mxu0 0
        %1354 = vmatpush2.bf16.msra.mxu0 0
        %1355 = vmatprep.subr.bf16.mxu0 0
        %1356 = vmatpush2.bf16.msra.mxu0 0
        %1357 = vmatprep.subr.bf16.mxu0 0
        %1358 = vmatpush2.bf16.msra.mxu0 0
        %1359 = vmatprep.subr.bf16.mxu0 0
        %1360 = vmatpush2.bf16.msra.mxu0 0
        %1361 = vmatprep.mubr.bf16.mxu0 0
        %1362 = vmatmul.mubr.bf16.gmra.mxu0 %v1323
        %v1363 = vpop.f32.mrf.mxu0
        %v1364 = vadd.f32 0.0, %v1363
        %v1365 = vpop.f32.mrf.mxu0
        %v1366 = vadd.f32 0.0, %v1365
        %v1367 = vpop.f32.mrf.mxu0
        %v1368 = vpop.f32.mrf.mxu0
        %1369 = vdwg.mxu0
        %v1370 = vadd.f32 %v1038, %v1364
        %v1371 = vadd.f32 %v1040, %v1366
        %vm1372 = vsmask.f32 3328
        %vm1373 = vsmask.f32 7440
        %vm1374 = vmor %vm1372, %vm1373
        %v1376 = vrot.slane %v395, 4
        %v1377 = vshll.u32 %v380, 16
        %v1379 = vrot.slane %v1377, 5
        %v1380 = vor.u32 %v1376, %v1379
        %v1381 = vrot.slane %v1380, 4
        %v1382 = vshll.u32 %v381, 16
        %v1384 = vrot.slane %v1382, 5
        %v1385 = vsel %vm1374, %v1381, %v1384
        %v1387 = vrot.slane %v407, 4
        %v1388 = vor.u32 %v1387, %v1384
        %v1389 = vrot.slane %v1388, 4
        %v1391 = vshll.u32 %v382, 16
        %v1393 = vrot.slane %v1391, 5
        %v1394 = vsel %vm1374, %v1389, %v1393
        %v1396 = vrot.slane %v396, 4
        %v1397 = vshll.u32 %v383, 16
        %v1399 = vrot.slane %v1397, 5
        %v1400 = vor.u32 %v1396, %v1399
        %v1401 = vrot.slane %v1400, 4
        %v1402 = vshll.u32 %v384, 16
        %v1404 = vrot.slane %v1402, 5
        %v1405 = vsel %vm1374, %v1401, %v1404
        %v1407 = vrot.slane %v408, 4
        %v1408 = vor.u32 %v1407, %v1404
        %v1409 = vrot.slane %v1408, 4
        %v1411 = vshll.u32 %v385, 16
        %v1413 = vrot.slane %v1411, 5
        %v1414 = vsel %vm1374, %v1409, %v1413
        %v1416 = vrot.slane %v401, 4
        %v1417 = vshll.u32 %v386, 16
        %v1419 = vrot.slane %v1417, 5
        %v1420 = vor.u32 %v1416, %v1419
        %v1421 = vrot.slane %v1420, 4
        %v1422 = vshll.u32 %v387, 16
        %v1424 = vrot.slane %v1422, 5
        %v1425 = vsel %vm1374, %v1421, %v1424
        %v1427 = vrot.slane %v413, 4
        %v1428 = vor.u32 %v1427, %v1424
        %v1429 = vrot.slane %v1428, 4
        %v1431 = vshll.u32 %v388, 16
        %v1433 = vrot.slane %v1431, 5
        %v1434 = vsel %vm1374, %v1429, %v1433
        %v1436 = vrot.slane %v402, 4
        %v1437 = vshll.u32 %v389, 16
        %v1439 = vrot.slane %v1437, 5
        %v1440 = vor.u32 %v1436, %v1439
        %v1441 = vrot.slane %v1440, 4
        %v1442 = vshll.u32 %v390, 16
        %v1444 = vrot.slane %v1442, 5
        %v1445 = vsel %vm1374, %v1441, %v1444
        %v1447 = vrot.slane %v414, 4
        %v1448 = vor.u32 %v1447, %v1444
        %v1449 = vrot.slane %v1448, 4
        %v1451 = vshll.u32 %v391, 16
        %v1453 = vrot.slane %v1451, 5
        %v1454 = vsel %vm1374, %v1449, %v1453
        %v1457 = vpack.i.b16 %v1405, %v1385
        %v1458 = vshrl.u32 %v1385, 16
        %v1459 = vshrl.u32 %v1405, 16
        %v1460 = vpack.i.b16 %v1459, %v1458
        %v1463 = vpack.i.b16 %v1445, %v1425
        %v1464 = vshrl.u32 %v1425, 16
        %v1465 = vshrl.u32 %v1445, 16
        %v1466 = vpack.i.b16 %v1465, %v1464
        %v1469 = vpack.i.b16 %v1414, %v1394
        %v1470 = vshrl.u32 %v1394, 16
        %v1471 = vshrl.u32 %v1414, 16
        %v1472 = vpack.i.b16 %v1471, %v1470
        %v1475 = vpack.i.b16 %v1454, %v1434
        %v1476 = vshrl.u32 %v1434, 16
        %v1477 = vshrl.u32 %v1454, 16
        %v1478 = vpack.i.b16 %v1477, %v1476
        %v1481 = vunpack.c.l.s4 1983009808
        %v1482 = vunpack.c.0.s8 %v1481
        %v1483 = vlaneseq
        %v1484 = vshrl.u32 %v1483, 7
        %v1485 = vsub.s32 %v1482, %v1484
        %v1486 = vrot.slane %v1457, %v1485
        %v1489 = vunpack.c.l.s4 1983009808
        %v1490 = vunpack.c.0.s8 %v1489
        %v1491 = vlaneseq
        %v1492 = vshrl.u32 %v1491, 7
        %v1493 = vsub.s32 %v1490, %v1492
        %v1494 = vrot.slane %v1463, %v1493
        %v1495 = vcombine.low %v1486, %v1494
        %v1496 = vcombine.high %v1486, %v1494
        %v1498 = vunpack.c.l.s4 1934713408
        %v1499 = vunpack.c.0.s8 %v1498
        %v1500 = vlaneseq
        %v1501 = vshrl.u32 %v1500, 7
        %v1502 = vsub.s32 %v1499, %v1501
        %v1503 = vrot.slane %v1495, %v1502
        %v1505 = vunpack.c.l.s4 1934713408
        %v1506 = vunpack.c.0.s8 %v1505
        %v1507 = vlaneseq
        %v1508 = vshrl.u32 %v1507, 7
        %v1509 = vsub.s32 %v1506, %v1508
        %v1510 = vrot.slane %v1496, %v1509
        %v1511 = vcombine.high %v1503, 0
        %v1512 = vcombine.high %v1510, 0
        %v1515 = vunpack.c.l.s4 1983009808
        %v1516 = vunpack.c.0.s8 %v1515
        %v1517 = vlaneseq
        %v1518 = vshrl.u32 %v1517, 7
        %v1519 = vsub.s32 %v1516, %v1518
        %v1520 = vrot.slane %v1460, %v1519
        %v1523 = vunpack.c.l.s4 1983009808
        %v1524 = vunpack.c.0.s8 %v1523
        %v1525 = vlaneseq
        %v1526 = vshrl.u32 %v1525, 7
        %v1527 = vsub.s32 %v1524, %v1526
        %v1528 = vrot.slane %v1466, %v1527
        %v1529 = vcombine.low %v1520, %v1528
        %v1530 = vcombine.high %v1520, %v1528
        %v1532 = vunpack.c.l.s4 1934713408
        %v1533 = vunpack.c.0.s8 %v1532
        %v1534 = vlaneseq
        %v1535 = vshrl.u32 %v1534, 7
        %v1536 = vsub.s32 %v1533, %v1535
        %v1537 = vrot.slane %v1529, %v1536
        %v1539 = vunpack.c.l.s4 1934713408
        %v1540 = vunpack.c.0.s8 %v1539
        %v1541 = vlaneseq
        %v1542 = vshrl.u32 %v1541, 7
        %v1543 = vsub.s32 %v1540, %v1542
        %v1544 = vrot.slane %v1530, %v1543
        %v1545 = vcombine.high %v1537, 0
        %v1546 = vcombine.high %v1544, 0
        %v1549 = vunpack.c.l.s4 1983009808
        %v1550 = vunpack.c.0.s8 %v1549
        %v1551 = vlaneseq
        %v1552 = vshrl.u32 %v1551, 7
        %v1553 = vsub.s32 %v1550, %v1552
        %v1554 = vrot.slane %v1469, %v1553
        %v1557 = vunpack.c.l.s4 1983009808
        %v1558 = vunpack.c.0.s8 %v1557
        %v1559 = vlaneseq
        %v1560 = vshrl.u32 %v1559, 7
        %v1561 = vsub.s32 %v1558, %v1560
        %v1562 = vrot.slane %v1475, %v1561
        %v1563 = vcombine.low %v1554, %v1562
        %v1564 = vcombine.high %v1554, %v1562
        %v1566 = vunpack.c.l.s4 1934713408
        %v1567 = vunpack.c.0.s8 %v1566
        %v1568 = vlaneseq
        %v1569 = vshrl.u32 %v1568, 7
        %v1570 = vsub.s32 %v1567, %v1569
        %v1571 = vrot.slane %v1563, %v1570
        %v1573 = vunpack.c.l.s4 1934713408
        %v1574 = vunpack.c.0.s8 %v1573
        %v1575 = vlaneseq
        %v1576 = vshrl.u32 %v1575, 7
        %v1577 = vsub.s32 %v1574, %v1576
        %v1578 = vrot.slane %v1564, %v1577
        %v1579 = vcombine.high %v1571, 0
        %v1580 = vcombine.high %v1578, 0
        %v1583 = vunpack.c.l.s4 1983009808
        %v1584 = vunpack.c.0.s8 %v1583
        %v1585 = vlaneseq
        %v1586 = vshrl.u32 %v1585, 7
        %v1587 = vsub.s32 %v1584, %v1586
        %v1588 = vrot.slane %v1472, %v1587
        %v1591 = vunpack.c.l.s4 1983009808
        %v1592 = vunpack.c.0.s8 %v1591
        %v1593 = vlaneseq
        %v1594 = vshrl.u32 %v1593, 7
        %v1595 = vsub.s32 %v1592, %v1594
        %v1596 = vrot.slane %v1478, %v1595
        %v1597 = vcombine.low %v1588, %v1596
        %v1598 = vcombine.high %v1588, %v1596
        %v1600 = vunpack.c.l.s4 1934713408
        %v1601 = vunpack.c.0.s8 %v1600
        %v1602 = vlaneseq
        %v1603 = vshrl.u32 %v1602, 7
        %v1604 = vsub.s32 %v1601, %v1603
        %v1605 = vrot.slane %v1597, %v1604
        %v1607 = vunpack.c.l.s4 1934713408
        %v1608 = vunpack.c.0.s8 %v1607
        %v1609 = vlaneseq
        %v1610 = vshrl.u32 %v1609, 7
        %v1611 = vsub.s32 %v1608, %v1610
        %v1612 = vrot.slane %v1598, %v1611
        %v1613 = vcombine.high %v1605, 0
        %v1614 = vcombine.high %v1612, 0
        %v1616 = vunpack.c.l.b16 %v1537
        %v1617 = vpack.c.b16 %v1616, %v1616
        %1618 = vrot.lane.b32.xlu0 %v1617, 16
        %v1619 = vpop.permute.xlu0 %1618
        %v1621 = vunpack.c.l.b16 %v1511
        %v1622 = vpack.c.b16 %v1621, %v1621
        %1623 = vrot.lane.b32.xlu0 %v1622, 32
        %v1624 = vpop.permute.xlu0 %1623
        %v1626 = vunpack.c.l.b16 %v1545
        %v1627 = vpack.c.b16 %v1626, %v1626
        %1628 = vrot.lane.b32.xlu0 %v1627, 48
        %v1629 = vpop.permute.xlu0 %1628
        %v1631 = vunpack.c.l.b16 %v1510
        %v1632 = vpack.c.b16 %v1631, %v1631
        %1633 = vrot.lane.b32.xlu0 %v1632, 64
        %v1634 = vpop.permute.xlu0 %1633
        %v1636 = vunpack.c.l.b16 %v1544
        %v1637 = vpack.c.b16 %v1636, %v1636
        %1638 = vrot.lane.b32.xlu0 %v1637, 80
        %v1639 = vpop.permute.xlu0 %1638
        %v1641 = vunpack.c.l.b16 %v1512
        %v1642 = vpack.c.b16 %v1641, %v1641
        %1643 = vrot.lane.b32.xlu0 %v1642, 96
        %v1644 = vpop.permute.xlu0 %1643
        %v1646 = vunpack.c.l.b16 %v1546
        %v1647 = vpack.c.b16 %v1646, %v1646
        %1648 = vrot.lane.b32.xlu0 %v1647, 112
        %v1649 = vpop.permute.xlu0 %1648
        %v1651 = vunpack.c.l.b16 %v1605
        %v1652 = vpack.c.b16 %v1651, %v1651
        %1653 = vrot.lane.b32.xlu0 %v1652, 16
        %v1654 = vpop.permute.xlu0 %1653
        %v1656 = vunpack.c.l.b16 %v1579
        %v1657 = vpack.c.b16 %v1656, %v1656
        %1658 = vrot.lane.b32.xlu0 %v1657, 32
        %v1659 = vpop.permute.xlu0 %1658
        %v1661 = vunpack.c.l.b16 %v1613
        %v1662 = vpack.c.b16 %v1661, %v1661
        %1663 = vrot.lane.b32.xlu0 %v1662, 48
        %v1664 = vpop.permute.xlu0 %1663
        %v1666 = vunpack.c.l.b16 %v1578
        %v1667 = vpack.c.b16 %v1666, %v1666
        %1668 = vrot.lane.b32.xlu0 %v1667, 64
        %v1669 = vpop.permute.xlu0 %1668
        %v1671 = vunpack.c.l.b16 %v1612
        %v1672 = vpack.c.b16 %v1671, %v1671
        %1673 = vrot.lane.b32.xlu0 %v1672, 80
        %v1674 = vpop.permute.xlu0 %1673
        %v1676 = vunpack.c.l.b16 %v1580
        %v1677 = vpack.c.b16 %v1676, %v1676
        %1678 = vrot.lane.b32.xlu0 %v1677, 96
        %v1679 = vpop.permute.xlu0 %1678
        %v1681 = vunpack.c.l.b16 %v1614
        %v1682 = vpack.c.b16 %v1681, %v1681
        %1683 = vrot.lane.b32.xlu0 %v1682, 112
        %v1684 = vpop.permute.xlu0 %1683
        %v1687 = vsel %vm622, %v1503, %v1619
        %v1689 = vsel %vm626, %v1687, %v1624
        %v1691 = vsel %vm629, %v1689, %v1629
        %v1693 = vsel %vm632, %v1691, %v1634
        %v1695 = vsel %vm635, %v1693, %v1639
        %v1697 = vsel %vm638, %v1695, %v1644
        %v1699 = vsel %vm641, %v1697, %v1649
        %v1702 = vsel %vm622, %v1571, %v1654
        %v1704 = vsel %vm626, %v1702, %v1659
        %v1706 = vsel %vm629, %v1704, %v1664
        %v1708 = vsel %vm632, %v1706, %v1669
        %v1710 = vsel %vm635, %v1708, %v1674
        %v1712 = vsel %vm638, %v1710, %v1679
        %v1714 = vsel %vm641, %v1712, %v1684
        %s1715 = scalar_lea.vmem [#allocation2], 6
        %v1716 = vld [vmem:[%s1715] sm:$0x3]
        %v1718 = vsel %vm946, %v1716, 0
        %v1720 = vsel %vm950, %v1699, 0
        %v1722 = vsel %vm950, %v1714, 0
        %1724 = vmatprep.subr.bf16.mxu0 0
        %1725 = vmatpush1.bf16.msra.mxu0 0
        %1726 = vmatprep.subr.bf16.mxu0 0
        %1727 = vmatpush1.bf16.msra.mxu0 0
        %1728 = vmatprep.subr.bf16.mxu0 0
        %1729 = vmatpush1.bf16.msra.mxu0 0
        %1730 = vmatprep.subr.bf16.mxu0 0
        %1731 = vmatpush1.bf16.msra.mxu0 0
        %1732 = vmatprep.subr.bf16.mxu0 0
        %1733 = vmatpush1.bf16.msra.mxu0 0
        %1734 = vmatprep.subr.bf16.mxu0 0
        %1735 = vmatpush1.bf16.msra.mxu0 0
        %1736 = vmatprep.subr.bf16.mxu0 0
        %1737 = vmatpush1.bf16.msra.mxu0 0
        %1738 = vmatprep.subr.bf16.mxu0 %v1722
        %1739 = vmatpush1.bf16.msra.mxu0 %v1720
        %1740 = vmatprep.subr.bf16.mxu0 0
        %1741 = vmatpush2.bf16.msra.mxu0 0
        %1742 = vmatprep.subr.bf16.mxu0 0
        %1743 = vmatpush2.bf16.msra.mxu0 0
        %1744 = vmatprep.subr.bf16.mxu0 0
        %1745 = vmatpush2.bf16.msra.mxu0 0
        %1746 = vmatprep.subr.bf16.mxu0 0
        %1747 = vmatpush2.bf16.msra.mxu0 0
        %1748 = vmatprep.subr.bf16.mxu0 0
        %1749 = vmatpush2.bf16.msra.mxu0 0
        %1750 = vmatprep.subr.bf16.mxu0 0
        %1751 = vmatpush2.bf16.msra.mxu0 0
        %1752 = vmatprep.subr.bf16.mxu0 0
        %1753 = vmatpush2.bf16.msra.mxu0 0
        %1754 = vmatprep.subr.bf16.mxu0 0
        %1755 = vmatpush2.bf16.msra.mxu0 0
        %1756 = vmatprep.mubr.bf16.mxu0 0
        %1757 = vmatmul.mubr.bf16.gmra.mxu0 %v1718
        %v1758 = vpop.f32.mrf.mxu0
        %v1759 = vadd.f32 0.0, %v1758
        %v1760 = vpop.f32.mrf.mxu0
        %v1761 = vadd.f32 0.0, %v1760
        %v1762 = vpop.f32.mrf.mxu0
        %v1763 = vpop.f32.mrf.mxu0
        %1764 = vdwg.mxu0
        %v1765 = vadd.f32 %v1370, %v1759
        %v1766 = vadd.f32 %v1371, %v1761
        %1767 = vrot.lane.b32.xlu0 %v1385, 127
        %v1768 = vpop.permute.xlu0 %1767
        %1769 = vrot.lane.b32.xlu0 %v1394, 127
        %v1770 = vpop.permute.xlu0 %1769
        %1771 = vrot.lane.b32.xlu0 %v1405, 127
        %v1772 = vpop.permute.xlu0 %1771
        %1773 = vrot.lane.b32.xlu0 %v1414, 127
        %v1774 = vpop.permute.xlu0 %1773
        %1775 = vrot.lane.b32.xlu0 %v1425, 127
        %v1776 = vpop.permute.xlu0 %1775
        %1777 = vrot.lane.b32.xlu0 %v1434, 127
        %v1778 = vpop.permute.xlu0 %1777
        %1779 = vrot.lane.b32.xlu0 %v1445, 127
        %v1780 = vpop.permute.xlu0 %1779
        %1781 = vrot.lane.b32.xlu0 %v1454, 127
        %v1782 = vpop.permute.xlu0 %1781
        %v1785 = vpack.i.b16 %v1772, %v1768
        %v1786 = vshrl.u32 %v1768, 16
        %v1787 = vshrl.u32 %v1772, 16
        %v1788 = vpack.i.b16 %v1787, %v1786
        %v1791 = vpack.i.b16 %v1780, %v1776
        %v1792 = vshrl.u32 %v1776, 16
        %v1793 = vshrl.u32 %v1780, 16
        %v1794 = vpack.i.b16 %v1793, %v1792
        %v1797 = vpack.i.b16 %v1774, %v1770
        %v1798 = vshrl.u32 %v1770, 16
        %v1799 = vshrl.u32 %v1774, 16
        %v1800 = vpack.i.b16 %v1799, %v1798
        %v1803 = vpack.i.b16 %v1782, %v1778
        %v1804 = vshrl.u32 %v1778, 16
        %v1805 = vshrl.u32 %v1782, 16
        %v1806 = vpack.i.b16 %v1805, %v1804
        %v1809 = vunpack.c.l.s4 1983009808
        %v1810 = vunpack.c.0.s8 %v1809
        %v1811 = vlaneseq
        %v1812 = vshrl.u32 %v1811, 7
        %v1813 = vsub.s32 %v1810, %v1812
        %v1814 = vrot.slane %v1785, %v1813
        %v1817 = vunpack.c.l.s4 1983009808
        %v1818 = vunpack.c.0.s8 %v1817
        %v1819 = vlaneseq
        %v1820 = vshrl.u32 %v1819, 7
        %v1821 = vsub.s32 %v1818, %v1820
        %v1822 = vrot.slane %v1791, %v1821
        %v1823 = vcombine.low %v1814, %v1822
        %v1824 = vcombine.high %v1814, %v1822
        %v1826 = vunpack.c.l.s4 1934713408
        %v1827 = vunpack.c.0.s8 %v1826
        %v1828 = vlaneseq
        %v1829 = vshrl.u32 %v1828, 7
        %v1830 = vsub.s32 %v1827, %v1829
        %v1831 = vrot.slane %v1823, %v1830
        %v1833 = vunpack.c.l.s4 1934713408
        %v1834 = vunpack.c.0.s8 %v1833
        %v1835 = vlaneseq
        %v1836 = vshrl.u32 %v1835, 7
        %v1837 = vsub.s32 %v1834, %v1836
        %v1838 = vrot.slane %v1824, %v1837
        %v1839 = vcombine.high %v1831, 0
        %v1840 = vcombine.high %v1838, 0
        %v1843 = vunpack.c.l.s4 1983009808
        %v1844 = vunpack.c.0.s8 %v1843
        %v1845 = vlaneseq
        %v1846 = vshrl.u32 %v1845, 7
        %v1847 = vsub.s32 %v1844, %v1846
        %v1848 = vrot.slane %v1788, %v1847
        %v1851 = vunpack.c.l.s4 1983009808
        %v1852 = vunpack.c.0.s8 %v1851
        %v1853 = vlaneseq
        %v1854 = vshrl.u32 %v1853, 7
        %v1855 = vsub.s32 %v1852, %v1854
        %v1856 = vrot.slane %v1794, %v1855
        %v1857 = vcombine.low %v1848, %v1856
        %v1858 = vcombine.high %v1848, %v1856
        %v1860 = vunpack.c.l.s4 1934713408
        %v1861 = vunpack.c.0.s8 %v1860
        %v1862 = vlaneseq
        %v1863 = vshrl.u32 %v1862, 7
        %v1864 = vsub.s32 %v1861, %v1863
        %v1865 = vrot.slane %v1857, %v1864
        %v1867 = vunpack.c.l.s4 1934713408
        %v1868 = vunpack.c.0.s8 %v1867
        %v1869 = vlaneseq
        %v1870 = vshrl.u32 %v1869, 7
        %v1871 = vsub.s32 %v1868, %v1870
        %v1872 = vrot.slane %v1858, %v1871
        %v1873 = vcombine.high %v1865, 0
        %v1874 = vcombine.high %v1872, 0
        %v1877 = vunpack.c.l.s4 1983009808
        %v1878 = vunpack.c.0.s8 %v1877
        %v1879 = vlaneseq
        %v1880 = vshrl.u32 %v1879, 7
        %v1881 = vsub.s32 %v1878, %v1880
        %v1882 = vrot.slane %v1797, %v1881
        %v1885 = vunpack.c.l.s4 1983009808
        %v1886 = vunpack.c.0.s8 %v1885
        %v1887 = vlaneseq
        %v1888 = vshrl.u32 %v1887, 7
        %v1889 = vsub.s32 %v1886, %v1888
        %v1890 = vrot.slane %v1803, %v1889
        %v1891 = vcombine.low %v1882, %v1890
        %v1892 = vcombine.high %v1882, %v1890
        %v1894 = vunpack.c.l.s4 1934713408
        %v1895 = vunpack.c.0.s8 %v1894
        %v1896 = vlaneseq
        %v1897 = vshrl.u32 %v1896, 7
        %v1898 = vsub.s32 %v1895, %v1897
        %v1899 = vrot.slane %v1891, %v1898
        %v1901 = vunpack.c.l.s4 1934713408
        %v1902 = vunpack.c.0.s8 %v1901
        %v1903 = vlaneseq
        %v1904 = vshrl.u32 %v1903, 7
        %v1905 = vsub.s32 %v1902, %v1904
        %v1906 = vrot.slane %v1892, %v1905
        %v1907 = vcombine.high %v1899, 0
        %v1908 = vcombine.high %v1906, 0
        %v1911 = vunpack.c.l.s4 1983009808
        %v1912 = vunpack.c.0.s8 %v1911
        %v1913 = vlaneseq
        %v1914 = vshrl.u32 %v1913, 7
        %v1915 = vsub.s32 %v1912, %v1914
        %v1916 = vrot.slane %v1800, %v1915
        %v1919 = vunpack.c.l.s4 1983009808
        %v1920 = vunpack.c.0.s8 %v1919
        %v1921 = vlaneseq
        %v1922 = vshrl.u32 %v1921, 7
        %v1923 = vsub.s32 %v1920, %v1922
        %v1924 = vrot.slane %v1806, %v1923
        %v1925 = vcombine.low %v1916, %v1924
        %v1926 = vcombine.high %v1916, %v1924
        %v1928 = vunpack.c.l.s4 1934713408
        %v1929 = vunpack.c.0.s8 %v1928
        %v1930 = vlaneseq
        %v1931 = vshrl.u32 %v1930, 7
        %v1932 = vsub.s32 %v1929, %v1931
        %v1933 = vrot.slane %v1925, %v1932
        %v1935 = vunpack.c.l.s4 1934713408
        %v1936 = vunpack.c.0.s8 %v1935
        %v1937 = vlaneseq
        %v1938 = vshrl.u32 %v1937, 7
        %v1939 = vsub.s32 %v1936, %v1938
        %v1940 = vrot.slane %v1926, %v1939
        %v1941 = vcombine.high %v1933, 0
        %v1942 = vcombine.high %v1940, 0
        %v1944 = vunpack.c.l.b16 %v1865
        %v1945 = vpack.c.b16 %v1944, %v1944
        %1946 = vrot.lane.b32.xlu0 %v1945, 16
        %v1947 = vpop.permute.xlu0 %1946
        %v1949 = vunpack.c.l.b16 %v1839
        %v1950 = vpack.c.b16 %v1949, %v1949
        %1951 = vrot.lane.b32.xlu0 %v1950, 32
        %v1952 = vpop.permute.xlu0 %1951
        %v1954 = vunpack.c.l.b16 %v1873
        %v1955 = vpack.c.b16 %v1954, %v1954
        %1956 = vrot.lane.b32.xlu0 %v1955, 48
        %v1957 = vpop.permute.xlu0 %1956
        %v1959 = vunpack.c.l.b16 %v1838
        %v1960 = vpack.c.b16 %v1959, %v1959
        %1961 = vrot.lane.b32.xlu0 %v1960, 64
        %v1962 = vpop.permute.xlu0 %1961
        %v1964 = vunpack.c.l.b16 %v1872
        %v1965 = vpack.c.b16 %v1964, %v1964
        %1966 = vrot.lane.b32.xlu0 %v1965, 80
        %v1967 = vpop.permute.xlu0 %1966
        %v1969 = vunpack.c.l.b16 %v1840
        %v1970 = vpack.c.b16 %v1969, %v1969
        %1971 = vrot.lane.b32.xlu0 %v1970, 96
        %v1972 = vpop.permute.xlu0 %1971
        %v1974 = vunpack.c.l.b16 %v1874
        %v1975 = vpack.c.b16 %v1974, %v1974
        %1976 = vrot.lane.b32.xlu0 %v1975, 112
        %v1977 = vpop.permute.xlu0 %1976
        %v1979 = vunpack.c.l.b16 %v1933
        %v1980 = vpack.c.b16 %v1979, %v1979
        %1981 = vrot.lane.b32.xlu0 %v1980, 16
        %v1982 = vpop.permute.xlu0 %1981
        %v1984 = vunpack.c.l.b16 %v1907
        %v1985 = vpack.c.b16 %v1984, %v1984
        %1986 = vrot.lane.b32.xlu0 %v1985, 32
        %v1987 = vpop.permute.xlu0 %1986
        %v1989 = vunpack.c.l.b16 %v1941
        %v1990 = vpack.c.b16 %v1989, %v1989
        %1991 = vrot.lane.b32.xlu0 %v1990, 48
        %v1992 = vpop.permute.xlu0 %1991
        %v1994 = vunpack.c.l.b16 %v1906
        %v1995 = vpack.c.b16 %v1994, %v1994
        %1996 = vrot.lane.b32.xlu0 %v1995, 64
        %v1997 = vpop.permute.xlu0 %1996
        %v1999 = vunpack.c.l.b16 %v1940
        %v2000 = vpack.c.b16 %v1999, %v1999
        %2001 = vrot.lane.b32.xlu0 %v2000, 80
        %v2002 = vpop.permute.xlu0 %2001
        %v2004 = vunpack.c.l.b16 %v1908
        %v2005 = vpack.c.b16 %v2004, %v2004
        %2006 = vrot.lane.b32.xlu0 %v2005, 96
        %v2007 = vpop.permute.xlu0 %2006
        %v2009 = vunpack.c.l.b16 %v1942
        %v2010 = vpack.c.b16 %v2009, %v2009
        %2011 = vrot.lane.b32.xlu0 %v2010, 112
        %v2012 = vpop.permute.xlu0 %2011
        %v2015 = vsel %vm622, %v1831, %v1947
        %v2017 = vsel %vm626, %v2015, %v1952
        %v2019 = vsel %vm629, %v2017, %v1957
        %v2021 = vsel %vm632, %v2019, %v1962
        %v2023 = vsel %vm635, %v2021, %v1967
        %v2025 = vsel %vm638, %v2023, %v1972
        %v2027 = vsel %vm641, %v2025, %v1977
        %v2030 = vsel %vm622, %v1899, %v1982
        %v2032 = vsel %vm626, %v2030, %v1987
        %v2034 = vsel %vm629, %v2032, %v1992
        %v2036 = vsel %vm632, %v2034, %v1997
        %v2038 = vsel %vm635, %v2036, %v2002
        %v2040 = vsel %vm638, %v2038, %v2007
        %v2042 = vsel %vm641, %v2040, %v2012
        %s2043 = scalar_lea.vmem [#allocation2], 8
        %v2044 = vld [vmem:[%s2043] sm:$0x3]
        %v2046 = vsel %vm946, %v2044, 0
        %v2048 = vsel %vm950, %v2027, 0
        %v2050 = vsel %vm950, %v2042, 0
        %2052 = vmatprep.subr.bf16.mxu0 0
        %2053 = vmatpush1.bf16.msra.mxu0 0
        %2054 = vmatprep.subr.bf16.mxu0 0
        %2055 = vmatpush1.bf16.msra.mxu0 0
        %2056 = vmatprep.subr.bf16.mxu0 0
        %2057 = vmatpush1.bf16.msra.mxu0 0
        %2058 = vmatprep.subr.bf16.mxu0 0
        %2059 = vmatpush1.bf16.msra.mxu0 0
        %2060 = vmatprep.subr.bf16.mxu0 0
        %2061 = vmatpush1.bf16.msra.mxu0 0
        %2062 = vmatprep.subr.bf16.mxu0 0
        %2063 = vmatpush1.bf16.msra.mxu0 0
        %2064 = vmatprep.subr.bf16.mxu0 0
        %2065 = vmatpush1.bf16.msra.mxu0 0
        %2066 = vmatprep.subr.bf16.mxu0 %v2050
        %2067 = vmatpush1.bf16.msra.mxu0 %v2048
        %2068 = vmatprep.subr.bf16.mxu0 0
        %2069 = vmatpush2.bf16.msra.mxu0 0
        %2070 = vmatprep.subr.bf16.mxu0 0
        %2071 = vmatpush2.bf16.msra.mxu0 0
        %2072 = vmatprep.subr.bf16.mxu0 0
        %2073 = vmatpush2.bf16.msra.mxu0 0
        %2074 = vmatprep.subr.bf16.mxu0 0
        %2075 = vmatpush2.bf16.msra.mxu0 0
        %2076 = vmatprep.subr.bf16.mxu0 0
        %2077 = vmatpush2.bf16.msra.mxu0 0
        %2078 = vmatprep.subr.bf16.mxu0 0
        %2079 = vmatpush2.bf16.msra.mxu0 0
        %2080 = vmatprep.subr.bf16.mxu0 0
        %2081 = vmatpush2.bf16.msra.mxu0 0
        %2082 = vmatprep.subr.bf16.mxu0 0
        %2083 = vmatpush2.bf16.msra.mxu0 0
        %2084 = vmatprep.mubr.bf16.mxu0 0
        %2085 = vmatmul.mubr.bf16.gmra.mxu0 %v2046
        %v2086 = vpop.f32.mrf.mxu0
        %v2087 = vadd.f32 0.0, %v2086
        %v2088 = vpop.f32.mrf.mxu0
        %v2089 = vadd.f32 0.0, %v2088
        %v2090 = vpop.f32.mrf.mxu0
        %v2091 = vpop.f32.mrf.mxu0
        %2092 = vdwg.mxu0
        %v2093 = vadd.f32 %v1765, %v2087
        %v2094 = vadd.f32 %v1766, %v2089
        %2095 = vrot.lane.b32.xlu0 %v1385, 126
        %v2096 = vpop.permute.xlu0 %2095
        %2097 = vrot.lane.b32.xlu0 %v1394, 126
        %v2098 = vpop.permute.xlu0 %2097
        %2099 = vrot.lane.b32.xlu0 %v1405, 126
        %v2100 = vpop.permute.xlu0 %2099
        %2101 = vrot.lane.b32.xlu0 %v1414, 126
        %v2102 = vpop.permute.xlu0 %2101
        %2103 = vrot.lane.b32.xlu0 %v1425, 126
        %v2104 = vpop.permute.xlu0 %2103
        %2105 = vrot.lane.b32.xlu0 %v1434, 126
        %v2106 = vpop.permute.xlu0 %2105
        %2107 = vrot.lane.b32.xlu0 %v1445, 126
        %v2108 = vpop.permute.xlu0 %2107
        %2109 = vrot.lane.b32.xlu0 %v1454, 126
        %v2110 = vpop.permute.xlu0 %2109
        %v2113 = vpack.i.b16 %v2100, %v2096
        %v2114 = vshrl.u32 %v2096, 16
        %v2115 = vshrl.u32 %v2100, 16
        %v2116 = vpack.i.b16 %v2115, %v2114
        %v2119 = vpack.i.b16 %v2108, %v2104
        %v2120 = vshrl.u32 %v2104, 16
        %v2121 = vshrl.u32 %v2108, 16
        %v2122 = vpack.i.b16 %v2121, %v2120
        %v2125 = vpack.i.b16 %v2102, %v2098
        %v2126 = vshrl.u32 %v2098, 16
        %v2127 = vshrl.u32 %v2102, 16
        %v2128 = vpack.i.b16 %v2127, %v2126
        %v2131 = vpack.i.b16 %v2110, %v2106
        %v2132 = vshrl.u32 %v2106, 16
        %v2133 = vshrl.u32 %v2110, 16
        %v2134 = vpack.i.b16 %v2133, %v2132
        %v2137 = vunpack.c.l.s4 1983009808
        %v2138 = vunpack.c.0.s8 %v2137
        %v2139 = vlaneseq
        %v2140 = vshrl.u32 %v2139, 7
        %v2141 = vsub.s32 %v2138, %v2140
        %v2142 = vrot.slane %v2113, %v2141
        %v2145 = vunpack.c.l.s4 1983009808
        %v2146 = vunpack.c.0.s8 %v2145
        %v2147 = vlaneseq
        %v2148 = vshrl.u32 %v2147, 7
        %v2149 = vsub.s32 %v2146, %v2148
        %v2150 = vrot.slane %v2119, %v2149
        %v2151 = vcombine.low %v2142, %v2150
        %v2152 = vcombine.high %v2142, %v2150
        %v2154 = vunpack.c.l.s4 1934713408
        %v2155 = vunpack.c.0.s8 %v2154
        %v2156 = vlaneseq
        %v2157 = vshrl.u32 %v2156, 7
        %v2158 = vsub.s32 %v2155, %v2157
        %v2159 = vrot.slane %v2151, %v2158
        %v2161 = vunpack.c.l.s4 1934713408
        %v2162 = vunpack.c.0.s8 %v2161
        %v2163 = vlaneseq
        %v2164 = vshrl.u32 %v2163, 7
        %v2165 = vsub.s32 %v2162, %v2164
        %v2166 = vrot.slane %v2152, %v2165
        %v2167 = vcombine.high %v2159, 0
        %v2168 = vcombine.high %v2166, 0
        %v2171 = vunpack.c.l.s4 1983009808
        %v2172 = vunpack.c.0.s8 %v2171
        %v2173 = vlaneseq
        %v2174 = vshrl.u32 %v2173, 7
        %v2175 = vsub.s32 %v2172, %v2174
        %v2176 = vrot.slane %v2116, %v2175
        %v2179 = vunpack.c.l.s4 1983009808
        %v2180 = vunpack.c.0.s8 %v2179
        %v2181 = vlaneseq
        %v2182 = vshrl.u32 %v2181, 7
        %v2183 = vsub.s32 %v2180, %v2182
        %v2184 = vrot.slane %v2122, %v2183
        %v2185 = vcombine.low %v2176, %v2184
        %v2186 = vcombine.high %v2176, %v2184
        %v2188 = vunpack.c.l.s4 1934713408
        %v2189 = vunpack.c.0.s8 %v2188
        %v2190 = vlaneseq
        %v2191 = vshrl.u32 %v2190, 7
        %v2192 = vsub.s32 %v2189, %v2191
        %v2193 = vrot.slane %v2185, %v2192
        %v2195 = vunpack.c.l.s4 1934713408
        %v2196 = vunpack.c.0.s8 %v2195
        %v2197 = vlaneseq
        %v2198 = vshrl.u32 %v2197, 7
        %v2199 = vsub.s32 %v2196, %v2198
        %v2200 = vrot.slane %v2186, %v2199
        %v2201 = vcombine.high %v2193, 0
        %v2202 = vcombine.high %v2200, 0
        %v2205 = vunpack.c.l.s4 1983009808
        %v2206 = vunpack.c.0.s8 %v2205
        %v2207 = vlaneseq
        %v2208 = vshrl.u32 %v2207, 7
        %v2209 = vsub.s32 %v2206, %v2208
        %v2210 = vrot.slane %v2125, %v2209
        %v2213 = vunpack.c.l.s4 1983009808
        %v2214 = vunpack.c.0.s8 %v2213
        %v2215 = vlaneseq
        %v2216 = vshrl.u32 %v2215, 7
        %v2217 = vsub.s32 %v2214, %v2216
        %v2218 = vrot.slane %v2131, %v2217
        %v2219 = vcombine.low %v2210, %v2218
        %v2220 = vcombine.high %v2210, %v2218
        %v2222 = vunpack.c.l.s4 1934713408
        %v2223 = vunpack.c.0.s8 %v2222
        %v2224 = vlaneseq
        %v2225 = vshrl.u32 %v2224, 7
        %v2226 = vsub.s32 %v2223, %v2225
        %v2227 = vrot.slane %v2219, %v2226
        %v2229 = vunpack.c.l.s4 1934713408
        %v2230 = vunpack.c.0.s8 %v2229
        %v2231 = vlaneseq
        %v2232 = vshrl.u32 %v2231, 7
        %v2233 = vsub.s32 %v2230, %v2232
        %v2234 = vrot.slane %v2220, %v2233
        %v2235 = vcombine.high %v2227, 0
        %v2236 = vcombine.high %v2234, 0
        %v2239 = vunpack.c.l.s4 1983009808
        %v2240 = vunpack.c.0.s8 %v2239
        %v2241 = vlaneseq
        %v2242 = vshrl.u32 %v2241, 7
        %v2243 = vsub.s32 %v2240, %v2242
        %v2244 = vrot.slane %v2128, %v2243
        %v2247 = vunpack.c.l.s4 1983009808
        %v2248 = vunpack.c.0.s8 %v2247
        %v2249 = vlaneseq
        %v2250 = vshrl.u32 %v2249, 7
        %v2251 = vsub.s32 %v2248, %v2250
        %v2252 = vrot.slane %v2134, %v2251
        %v2253 = vcombine.low %v2244, %v2252
        %v2254 = vcombine.high %v2244, %v2252
        %v2256 = vunpack.c.l.s4 1934713408
        %v2257 = vunpack.c.0.s8 %v2256
        %v2258 = vlaneseq
        %v2259 = vshrl.u32 %v2258, 7
        %v2260 = vsub.s32 %v2257, %v2259
        %v2261 = vrot.slane %v2253, %v2260
        %v2263 = vunpack.c.l.s4 1934713408
        %v2264 = vunpack.c.0.s8 %v2263
        %v2265 = vlaneseq
        %v2266 = vshrl.u32 %v2265, 7
        %v2267 = vsub.s32 %v2264, %v2266
        %v2268 = vrot.slane %v2254, %v2267
        %v2269 = vcombine.high %v2261, 0
        %v2270 = vcombine.high %v2268, 0
        %v2272 = vunpack.c.l.b16 %v2193
        %v2273 = vpack.c.b16 %v2272, %v2272
        %2274 = vrot.lane.b32.xlu0 %v2273, 16
        %v2275 = vpop.permute.xlu0 %2274
        %v2277 = vunpack.c.l.b16 %v2167
        %v2278 = vpack.c.b16 %v2277, %v2277
        %2279 = vrot.lane.b32.xlu0 %v2278, 32
        %v2280 = vpop.permute.xlu0 %2279
        %v2282 = vunpack.c.l.b16 %v2201
        %v2283 = vpack.c.b16 %v2282, %v2282
        %2284 = vrot.lane.b32.xlu0 %v2283, 48
        %v2285 = vpop.permute.xlu0 %2284
        %v2287 = vunpack.c.l.b16 %v2166
        %v2288 = vpack.c.b16 %v2287, %v2287
        %2289 = vrot.lane.b32.xlu0 %v2288, 64
        %v2290 = vpop.permute.xlu0 %2289
        %v2292 = vunpack.c.l.b16 %v2200
        %v2293 = vpack.c.b16 %v2292, %v2292
        %2294 = vrot.lane.b32.xlu0 %v2293, 80
        %v2295 = vpop.permute.xlu0 %2294
        %v2297 = vunpack.c.l.b16 %v2168
        %v2298 = vpack.c.b16 %v2297, %v2297
        %2299 = vrot.lane.b32.xlu0 %v2298, 96
        %v2300 = vpop.permute.xlu0 %2299
        %v2302 = vunpack.c.l.b16 %v2202
        %v2303 = vpack.c.b16 %v2302, %v2302
        %2304 = vrot.lane.b32.xlu0 %v2303, 112
        %v2305 = vpop.permute.xlu0 %2304
        %v2307 = vunpack.c.l.b16 %v2261
        %v2308 = vpack.c.b16 %v2307, %v2307
        %2309 = vrot.lane.b32.xlu0 %v2308, 16
        %v2310 = vpop.permute.xlu0 %2309
        %v2312 = vunpack.c.l.b16 %v2235
        %v2313 = vpack.c.b16 %v2312, %v2312
        %2314 = vrot.lane.b32.xlu0 %v2313, 32
        %v2315 = vpop.permute.xlu0 %2314
        %v2317 = vunpack.c.l.b16 %v2269
        %v2318 = vpack.c.b16 %v2317, %v2317
        %2319 = vrot.lane.b32.xlu0 %v2318, 48
        %v2320 = vpop.permute.xlu0 %2319
        %v2322 = vunpack.c.l.b16 %v2234
        %v2323 = vpack.c.b16 %v2322, %v2322
        %2324 = vrot.lane.b32.xlu0 %v2323, 64
        %v2325 = vpop.permute.xlu0 %2324
        %v2327 = vunpack.c.l.b16 %v2268
        %v2328 = vpack.c.b16 %v2327, %v2327
        %2329 = vrot.lane.b32.xlu0 %v2328, 80
        %v2330 = vpop.permute.xlu0 %2329
        %v2332 = vunpack.c.l.b16 %v2236
        %v2333 = vpack.c.b16 %v2332, %v2332
        %2334 = vrot.lane.b32.xlu0 %v2333, 96
        %v2335 = vpop.permute.xlu0 %2334
        %v2337 = vunpack.c.l.b16 %v2270
        %v2338 = vpack.c.b16 %v2337, %v2337
        %2339 = vrot.lane.b32.xlu0 %v2338, 112
        %v2340 = vpop.permute.xlu0 %2339
        %v2343 = vsel %vm622, %v2159, %v2275
        %v2345 = vsel %vm626, %v2343, %v2280
        %v2347 = vsel %vm629, %v2345, %v2285
        %v2349 = vsel %vm632, %v2347, %v2290
        %v2351 = vsel %vm635, %v2349, %v2295
        %v2353 = vsel %vm638, %v2351, %v2300
        %v2355 = vsel %vm641, %v2353, %v2305
        %v2358 = vsel %vm622, %v2227, %v2310
        %v2360 = vsel %vm626, %v2358, %v2315
        %v2362 = vsel %vm629, %v2360, %v2320
        %v2364 = vsel %vm632, %v2362, %v2325
        %v2366 = vsel %vm635, %v2364, %v2330
        %v2368 = vsel %vm638, %v2366, %v2335
        %v2370 = vsel %vm641, %v2368, %v2340
        %s2371 = scalar_lea.vmem [#allocation2], 10
        %v2372 = vld [vmem:[%s2371] sm:$0x3]
        %v2374 = vsel %vm946, %v2372, 0
        %v2376 = vsel %vm950, %v2355, 0
        %v2378 = vsel %vm950, %v2370, 0
        %2380 = vmatprep.subr.bf16.mxu0 0
        %2381 = vmatpush1.bf16.msra.mxu0 0
        %2382 = vmatprep.subr.bf16.mxu0 0
        %2383 = vmatpush1.bf16.msra.mxu0 0
        %2384 = vmatprep.subr.bf16.mxu0 0
        %2385 = vmatpush1.bf16.msra.mxu0 0
        %2386 = vmatprep.subr.bf16.mxu0 0
        %2387 = vmatpush1.bf16.msra.mxu0 0
        %2388 = vmatprep.subr.bf16.mxu0 0
        %2389 = vmatpush1.bf16.msra.mxu0 0
        %2390 = vmatprep.subr.bf16.mxu0 0
        %2391 = vmatpush1.bf16.msra.mxu0 0
        %2392 = vmatprep.subr.bf16.mxu0 0
        %2393 = vmatpush1.bf16.msra.mxu0 0
        %2394 = vmatprep.subr.bf16.mxu0 %v2378
        %2395 = vmatpush1.bf16.msra.mxu0 %v2376
        %2396 = vmatprep.subr.bf16.mxu0 0
        %2397 = vmatpush2.bf16.msra.mxu0 0
        %2398 = vmatprep.subr.bf16.mxu0 0
        %2399 = vmatpush2.bf16.msra.mxu0 0
        %2400 = vmatprep.subr.bf16.mxu0 0
        %2401 = vmatpush2.bf16.msra.mxu0 0
        %2402 = vmatprep.subr.bf16.mxu0 0
        %2403 = vmatpush2.bf16.msra.mxu0 0
        %2404 = vmatprep.subr.bf16.mxu0 0
        %2405 = vmatpush2.bf16.msra.mxu0 0
        %2406 = vmatprep.subr.bf16.mxu0 0
        %2407 = vmatpush2.bf16.msra.mxu0 0
        %2408 = vmatprep.subr.bf16.mxu0 0
        %2409 = vmatpush2.bf16.msra.mxu0 0
        %2410 = vmatprep.subr.bf16.mxu0 0
        %2411 = vmatpush2.bf16.msra.mxu0 0
        %2412 = vmatprep.mubr.bf16.mxu0 0
        %2413 = vmatmul.mubr.bf16.gmra.mxu0 %v2374
        %v2414 = vpop.f32.mrf.mxu0
        %v2415 = vadd.f32 0.0, %v2414
        %v2416 = vpop.f32.mrf.mxu0
        %v2417 = vadd.f32 0.0, %v2416
        %v2418 = vpop.f32.mrf.mxu0
        %v2419 = vpop.f32.mrf.mxu0
        %2420 = vdwg.mxu0
        %v2421 = vadd.f32 %v2093, %v2415
        %v2422 = vadd.f32 %v2094, %v2417
        %vm2427 = vcmask 1042432
        %vm2428 = vcmask 1046532
        %vm2429 = vmor %vm2427, %vm2428
        %v2430 = vrot.slane %v380, 5
        %v2431 = vrot.slane %v2430, 4
        %v2432 = vrot.slane %v381, 5
        %v2433 = vsel %vm2429, %v2431, %v2432
        %v2434 = vrot.slane %v2432, 4
        %v2435 = vrot.slane %v382, 5
        %v2436 = vsel %vm2429, %v2434, %v2435
        %v2437 = vrot.slane %v383, 5
        %v2438 = vrot.slane %v2437, 4
        %v2439 = vrot.slane %v384, 5
        %v2440 = vsel %vm2429, %v2438, %v2439
        %v2441 = vrot.slane %v2439, 4
        %v2442 = vrot.slane %v385, 5
        %v2443 = vsel %vm2429, %v2441, %v2442
        %v2444 = vrot.slane %v386, 5
        %v2445 = vrot.slane %v2444, 4
        %v2446 = vrot.slane %v387, 5
        %v2447 = vsel %vm2429, %v2445, %v2446
        %v2448 = vrot.slane %v2446, 4
        %v2449 = vrot.slane %v388, 5
        %v2450 = vsel %vm2429, %v2448, %v2449
        %v2451 = vrot.slane %v389, 5
        %v2452 = vrot.slane %v2451, 4
        %v2453 = vrot.slane %v390, 5
        %v2454 = vsel %vm2429, %v2452, %v2453
        %v2455 = vrot.slane %v2453, 4
        %v2456 = vrot.slane %v391, 5
        %v2457 = vsel %vm2429, %v2455, %v2456
        %v2460 = vpack.i.b16 %v2440, %v2433
        %v2461 = vshrl.u32 %v2433, 16
        %v2462 = vshrl.u32 %v2440, 16
        %v2463 = vpack.i.b16 %v2462, %v2461
        %v2466 = vpack.i.b16 %v2454, %v2447
        %v2467 = vshrl.u32 %v2447, 16
        %v2468 = vshrl.u32 %v2454, 16
        %v2469 = vpack.i.b16 %v2468, %v2467
        %v2472 = vpack.i.b16 %v2443, %v2436
        %v2473 = vshrl.u32 %v2436, 16
        %v2474 = vshrl.u32 %v2443, 16
        %v2475 = vpack.i.b16 %v2474, %v2473
        %v2478 = vpack.i.b16 %v2457, %v2450
        %v2479 = vshrl.u32 %v2450, 16
        %v2480 = vshrl.u32 %v2457, 16
        %v2481 = vpack.i.b16 %v2480, %v2479
        %v2484 = vunpack.c.l.s4 1983009808
        %v2485 = vunpack.c.0.s8 %v2484
        %v2486 = vlaneseq
        %v2487 = vshrl.u32 %v2486, 7
        %v2488 = vsub.s32 %v2485, %v2487
        %v2489 = vrot.slane %v2460, %v2488
        %v2492 = vunpack.c.l.s4 1983009808
        %v2493 = vunpack.c.0.s8 %v2492
        %v2494 = vlaneseq
        %v2495 = vshrl.u32 %v2494, 7
        %v2496 = vsub.s32 %v2493, %v2495
        %v2497 = vrot.slane %v2466, %v2496
        %v2498 = vcombine.low %v2489, %v2497
        %v2499 = vcombine.high %v2489, %v2497
        %v2501 = vunpack.c.l.s4 1934713408
        %v2502 = vunpack.c.0.s8 %v2501
        %v2503 = vlaneseq
        %v2504 = vshrl.u32 %v2503, 7
        %v2505 = vsub.s32 %v2502, %v2504
        %v2506 = vrot.slane %v2498, %v2505
        %v2508 = vunpack.c.l.s4 1934713408
        %v2509 = vunpack.c.0.s8 %v2508
        %v2510 = vlaneseq
        %v2511 = vshrl.u32 %v2510, 7
        %v2512 = vsub.s32 %v2509, %v2511
        %v2513 = vrot.slane %v2499, %v2512
        %v2514 = vcombine.high %v2506, 0
        %v2515 = vcombine.high %v2513, 0
        %v2518 = vunpack.c.l.s4 1983009808
        %v2519 = vunpack.c.0.s8 %v2518
        %v2520 = vlaneseq
        %v2521 = vshrl.u32 %v2520, 7
        %v2522 = vsub.s32 %v2519, %v2521
        %v2523 = vrot.slane %v2463, %v2522
        %v2526 = vunpack.c.l.s4 1983009808
        %v2527 = vunpack.c.0.s8 %v2526
        %v2528 = vlaneseq
        %v2529 = vshrl.u32 %v2528, 7
        %v2530 = vsub.s32 %v2527, %v2529
        %v2531 = vrot.slane %v2469, %v2530
        %v2532 = vcombine.low %v2523, %v2531
        %v2533 = vcombine.high %v2523, %v2531
        %v2535 = vunpack.c.l.s4 1934713408
        %v2536 = vunpack.c.0.s8 %v2535
        %v2537 = vlaneseq
        %v2538 = vshrl.u32 %v2537, 7
        %v2539 = vsub.s32 %v2536, %v2538
        %v2540 = vrot.slane %v2532, %v2539
        %v2542 = vunpack.c.l.s4 1934713408
        %v2543 = vunpack.c.0.s8 %v2542
        %v2544 = vlaneseq
        %v2545 = vshrl.u32 %v2544, 7
        %v2546 = vsub.s32 %v2543, %v2545
        %v2547 = vrot.slane %v2533, %v2546
        %v2548 = vcombine.high %v2540, 0
        %v2549 = vcombine.high %v2547, 0
        %v2552 = vunpack.c.l.s4 1983009808
        %v2553 = vunpack.c.0.s8 %v2552
        %v2554 = vlaneseq
        %v2555 = vshrl.u32 %v2554, 7
        %v2556 = vsub.s32 %v2553, %v2555
        %v2557 = vrot.slane %v2472, %v2556
        %v2560 = vunpack.c.l.s4 1983009808
        %v2561 = vunpack.c.0.s8 %v2560
        %v2562 = vlaneseq
        %v2563 = vshrl.u32 %v2562, 7
        %v2564 = vsub.s32 %v2561, %v2563
        %v2565 = vrot.slane %v2478, %v2564
        %v2566 = vcombine.low %v2557, %v2565
        %v2567 = vcombine.high %v2557, %v2565
        %v2569 = vunpack.c.l.s4 1934713408
        %v2570 = vunpack.c.0.s8 %v2569
        %v2571 = vlaneseq
        %v2572 = vshrl.u32 %v2571, 7
        %v2573 = vsub.s32 %v2570, %v2572
        %v2574 = vrot.slane %v2566, %v2573
        %v2576 = vunpack.c.l.s4 1934713408
        %v2577 = vunpack.c.0.s8 %v2576
        %v2578 = vlaneseq
        %v2579 = vshrl.u32 %v2578, 7
        %v2580 = vsub.s32 %v2577, %v2579
        %v2581 = vrot.slane %v2567, %v2580
        %v2582 = vcombine.high %v2574, 0
        %v2583 = vcombine.high %v2581, 0
        %v2586 = vunpack.c.l.s4 1983009808
        %v2587 = vunpack.c.0.s8 %v2586
        %v2588 = vlaneseq
        %v2589 = vshrl.u32 %v2588, 7
        %v2590 = vsub.s32 %v2587, %v2589
        %v2591 = vrot.slane %v2475, %v2590
        %v2594 = vunpack.c.l.s4 1983009808
        %v2595 = vunpack.c.0.s8 %v2594
        %v2596 = vlaneseq
        %v2597 = vshrl.u32 %v2596, 7
        %v2598 = vsub.s32 %v2595, %v2597
        %v2599 = vrot.slane %v2481, %v2598
        %v2600 = vcombine.low %v2591, %v2599
        %v2601 = vcombine.high %v2591, %v2599
        %v2603 = vunpack.c.l.s4 1934713408
        %v2604 = vunpack.c.0.s8 %v2603
        %v2605 = vlaneseq
        %v2606 = vshrl.u32 %v2605, 7
        %v2607 = vsub.s32 %v2604, %v2606
        %v2608 = vrot.slane %v2600, %v2607
        %v2610 = vunpack.c.l.s4 1934713408
        %v2611 = vunpack.c.0.s8 %v2610
        %v2612 = vlaneseq
        %v2613 = vshrl.u32 %v2612, 7
        %v2614 = vsub.s32 %v2611, %v2613
        %v2615 = vrot.slane %v2601, %v2614
        %v2616 = vcombine.high %v2608, 0
        %v2617 = vcombine.high %v2615, 0
        %v2619 = vunpack.c.l.b16 %v2540
        %v2620 = vpack.c.b16 %v2619, %v2619
        %2621 = vrot.lane.b32.xlu0 %v2620, 16
        %v2622 = vpop.permute.xlu0 %2621
        %v2624 = vunpack.c.l.b16 %v2514
        %v2625 = vpack.c.b16 %v2624, %v2624
        %2626 = vrot.lane.b32.xlu0 %v2625, 32
        %v2627 = vpop.permute.xlu0 %2626
        %v2629 = vunpack.c.l.b16 %v2548
        %v2630 = vpack.c.b16 %v2629, %v2629
        %2631 = vrot.lane.b32.xlu0 %v2630, 48
        %v2632 = vpop.permute.xlu0 %2631
        %v2634 = vunpack.c.l.b16 %v2513
        %v2635 = vpack.c.b16 %v2634, %v2634
        %2636 = vrot.lane.b32.xlu0 %v2635, 64
        %v2637 = vpop.permute.xlu0 %2636
        %v2639 = vunpack.c.l.b16 %v2547
        %v2640 = vpack.c.b16 %v2639, %v2639
        %2641 = vrot.lane.b32.xlu0 %v2640, 80
        %v2642 = vpop.permute.xlu0 %2641
        %v2644 = vunpack.c.l.b16 %v2515
        %v2645 = vpack.c.b16 %v2644, %v2644
        %2646 = vrot.lane.b32.xlu0 %v2645, 96
        %v2647 = vpop.permute.xlu0 %2646
        %v2649 = vunpack.c.l.b16 %v2549
        %v2650 = vpack.c.b16 %v2649, %v2649
        %2651 = vrot.lane.b32.xlu0 %v2650, 112
        %v2652 = vpop.permute.xlu0 %2651
        %v2654 = vunpack.c.l.b16 %v2608
        %v2655 = vpack.c.b16 %v2654, %v2654
        %2656 = vrot.lane.b32.xlu0 %v2655, 16
        %v2657 = vpop.permute.xlu0 %2656
        %v2659 = vunpack.c.l.b16 %v2582
        %v2660 = vpack.c.b16 %v2659, %v2659
        %2661 = vrot.lane.b32.xlu0 %v2660, 32
        %v2662 = vpop.permute.xlu0 %2661
        %v2664 = vunpack.c.l.b16 %v2616
        %v2665 = vpack.c.b16 %v2664, %v2664
        %2666 = vrot.lane.b32.xlu0 %v2665, 48
        %v2667 = vpop.permute.xlu0 %2666
        %v2669 = vunpack.c.l.b16 %v2581
        %v2670 = vpack.c.b16 %v2669, %v2669
        %2671 = vrot.lane.b32.xlu0 %v2670, 64
        %v2672 = vpop.permute.xlu0 %2671
        %v2674 = vunpack.c.l.b16 %v2615
        %v2675 = vpack.c.b16 %v2674, %v2674
        %2676 = vrot.lane.b32.xlu0 %v2675, 80
        %v2677 = vpop.permute.xlu0 %2676
        %v2679 = vunpack.c.l.b16 %v2583
        %v2680 = vpack.c.b16 %v2679, %v2679
        %2681 = vrot.lane.b32.xlu0 %v2680, 96
        %v2682 = vpop.permute.xlu0 %2681
        %v2684 = vunpack.c.l.b16 %v2617
        %v2685 = vpack.c.b16 %v2684, %v2684
        %2686 = vrot.lane.b32.xlu0 %v2685, 112
        %v2687 = vpop.permute.xlu0 %2686
        %v2690 = vsel %vm622, %v2506, %v2622
        %v2692 = vsel %vm626, %v2690, %v2627
        %v2694 = vsel %vm629, %v2692, %v2632
        %v2696 = vsel %vm632, %v2694, %v2637
        %v2698 = vsel %vm635, %v2696, %v2642
        %v2700 = vsel %vm638, %v2698, %v2647
        %v2702 = vsel %vm641, %v2700, %v2652
        %v2705 = vsel %vm622, %v2574, %v2657
        %v2707 = vsel %vm626, %v2705, %v2662
        %v2709 = vsel %vm629, %v2707, %v2667
        %v2711 = vsel %vm632, %v2709, %v2672
        %v2713 = vsel %vm635, %v2711, %v2677
        %v2715 = vsel %vm638, %v2713, %v2682
        %v2717 = vsel %vm641, %v2715, %v2687
        %s2718 = scalar_lea.vmem [#allocation2], 12
        %v2719 = vld [vmem:[%s2718] sm:$0x3]
        %v2721 = vsel %vm946, %v2719, 0
        %v2723 = vsel %vm950, %v2702, 0
        %v2725 = vsel %vm950, %v2717, 0
        %2727 = vmatprep.subr.bf16.mxu0 0
        %2728 = vmatpush1.bf16.msra.mxu0 0
        %2729 = vmatprep.subr.bf16.mxu0 0
        %2730 = vmatpush1.bf16.msra.mxu0 0
        %2731 = vmatprep.subr.bf16.mxu0 0
        %2732 = vmatpush1.bf16.msra.mxu0 0
        %2733 = vmatprep.subr.bf16.mxu0 0
        %2734 = vmatpush1.bf16.msra.mxu0 0
        %2735 = vmatprep.subr.bf16.mxu0 0
        %2736 = vmatpush1.bf16.msra.mxu0 0
        %2737 = vmatprep.subr.bf16.mxu0 0
        %2738 = vmatpush1.bf16.msra.mxu0 0
        %2739 = vmatprep.subr.bf16.mxu0 0
        %2740 = vmatpush1.bf16.msra.mxu0 0
        %2741 = vmatprep.subr.bf16.mxu0 %v2725
        %2742 = vmatpush1.bf16.msra.mxu0 %v2723
        %2743 = vmatprep.subr.bf16.mxu0 0
        %2744 = vmatpush2.bf16.msra.mxu0 0
        %2745 = vmatprep.subr.bf16.mxu0 0
        %2746 = vmatpush2.bf16.msra.mxu0 0
        %2747 = vmatprep.subr.bf16.mxu0 0
        %2748 = vmatpush2.bf16.msra.mxu0 0
        %2749 = vmatprep.subr.bf16.mxu0 0
        %2750 = vmatpush2.bf16.msra.mxu0 0
        %2751 = vmatprep.subr.bf16.mxu0 0
        %2752 = vmatpush2.bf16.msra.mxu0 0
        %2753 = vmatprep.subr.bf16.mxu0 0
        %2754 = vmatpush2.bf16.msra.mxu0 0
        %2755 = vmatprep.subr.bf16.mxu0 0
        %2756 = vmatpush2.bf16.msra.mxu0 0
        %2757 = vmatprep.subr.bf16.mxu0 0
        %2758 = vmatpush2.bf16.msra.mxu0 0
        %2759 = vmatprep.mubr.bf16.mxu0 0
        %2760 = vmatmul.mubr.bf16.gmra.mxu0 %v2721
        %v2761 = vpop.f32.mrf.mxu0
        %v2762 = vadd.f32 0.0, %v2761
        %v2763 = vpop.f32.mrf.mxu0
        %v2764 = vadd.f32 0.0, %v2763
        %v2765 = vpop.f32.mrf.mxu0
        %v2766 = vpop.f32.mrf.mxu0
        %2767 = vdwg.mxu0
        %v2768 = vadd.f32 %v2421, %v2762
        %v2769 = vadd.f32 %v2422, %v2764
        %2770 = vrot.lane.b32.xlu0 %v2433, 127
        %v2771 = vpop.permute.xlu0 %2770
        %2772 = vrot.lane.b32.xlu0 %v2436, 127
        %v2773 = vpop.permute.xlu0 %2772
        %2774 = vrot.lane.b32.xlu0 %v2440, 127
        %v2775 = vpop.permute.xlu0 %2774
        %2776 = vrot.lane.b32.xlu0 %v2443, 127
        %v2777 = vpop.permute.xlu0 %2776
        %2778 = vrot.lane.b32.xlu0 %v2447, 127
        %v2779 = vpop.permute.xlu0 %2778
        %2780 = vrot.lane.b32.xlu0 %v2450, 127
        %v2781 = vpop.permute.xlu0 %2780
        %2782 = vrot.lane.b32.xlu0 %v2454, 127
        %v2783 = vpop.permute.xlu0 %2782
        %2784 = vrot.lane.b32.xlu0 %v2457, 127
        %v2785 = vpop.permute.xlu0 %2784
        %v2788 = vpack.i.b16 %v2775, %v2771
        %v2789 = vshrl.u32 %v2771, 16
        %v2790 = vshrl.u32 %v2775, 16
        %v2791 = vpack.i.b16 %v2790, %v2789
        %v2794 = vpack.i.b16 %v2783, %v2779
        %v2795 = vshrl.u32 %v2779, 16
        %v2796 = vshrl.u32 %v2783, 16
        %v2797 = vpack.i.b16 %v2796, %v2795
        %v2800 = vpack.i.b16 %v2777, %v2773
        %v2801 = vshrl.u32 %v2773, 16
        %v2802 = vshrl.u32 %v2777, 16
        %v2803 = vpack.i.b16 %v2802, %v2801
        %v2806 = vpack.i.b16 %v2785, %v2781
        %v2807 = vshrl.u32 %v2781, 16
        %v2808 = vshrl.u32 %v2785, 16
        %v2809 = vpack.i.b16 %v2808, %v2807
        %v2812 = vunpack.c.l.s4 1983009808
        %v2813 = vunpack.c.0.s8 %v2812
        %v2814 = vlaneseq
        %v2815 = vshrl.u32 %v2814, 7
        %v2816 = vsub.s32 %v2813, %v2815
        %v2817 = vrot.slane %v2788, %v2816
        %v2820 = vunpack.c.l.s4 1983009808
        %v2821 = vunpack.c.0.s8 %v2820
        %v2822 = vlaneseq
        %v2823 = vshrl.u32 %v2822, 7
        %v2824 = vsub.s32 %v2821, %v2823
        %v2825 = vrot.slane %v2794, %v2824
        %v2826 = vcombine.low %v2817, %v2825
        %v2827 = vcombine.high %v2817, %v2825
        %v2829 = vunpack.c.l.s4 1934713408
        %v2830 = vunpack.c.0.s8 %v2829
        %v2831 = vlaneseq
        %v2832 = vshrl.u32 %v2831, 7
        %v2833 = vsub.s32 %v2830, %v2832
        %v2834 = vrot.slane %v2826, %v2833
        %v2836 = vunpack.c.l.s4 1934713408
        %v2837 = vunpack.c.0.s8 %v2836
        %v2838 = vlaneseq
        %v2839 = vshrl.u32 %v2838, 7
        %v2840 = vsub.s32 %v2837, %v2839
        %v2841 = vrot.slane %v2827, %v2840
        %v2842 = vcombine.high %v2834, 0
        %v2843 = vcombine.high %v2841, 0
        %v2846 = vunpack.c.l.s4 1983009808
        %v2847 = vunpack.c.0.s8 %v2846
        %v2848 = vlaneseq
        %v2849 = vshrl.u32 %v2848, 7
        %v2850 = vsub.s32 %v2847, %v2849
        %v2851 = vrot.slane %v2791, %v2850
        %v2854 = vunpack.c.l.s4 1983009808
        %v2855 = vunpack.c.0.s8 %v2854
        %v2856 = vlaneseq
        %v2857 = vshrl.u32 %v2856, 7
        %v2858 = vsub.s32 %v2855, %v2857
        %v2859 = vrot.slane %v2797, %v2858
        %v2860 = vcombine.low %v2851, %v2859
        %v2861 = vcombine.high %v2851, %v2859
        %v2863 = vunpack.c.l.s4 1934713408
        %v2864 = vunpack.c.0.s8 %v2863
        %v2865 = vlaneseq
        %v2866 = vshrl.u32 %v2865, 7
        %v2867 = vsub.s32 %v2864, %v2866
        %v2868 = vrot.slane %v2860, %v2867
        %v2870 = vunpack.c.l.s4 1934713408
        %v2871 = vunpack.c.0.s8 %v2870
        %v2872 = vlaneseq
        %v2873 = vshrl.u32 %v2872, 7
        %v2874 = vsub.s32 %v2871, %v2873
        %v2875 = vrot.slane %v2861, %v2874
        %v2876 = vcombine.high %v2868, 0
        %v2877 = vcombine.high %v2875, 0
        %v2880 = vunpack.c.l.s4 1983009808
        %v2881 = vunpack.c.0.s8 %v2880
        %v2882 = vlaneseq
        %v2883 = vshrl.u32 %v2882, 7
        %v2884 = vsub.s32 %v2881, %v2883
        %v2885 = vrot.slane %v2800, %v2884
        %v2888 = vunpack.c.l.s4 1983009808
        %v2889 = vunpack.c.0.s8 %v2888
        %v2890 = vlaneseq
        %v2891 = vshrl.u32 %v2890, 7
        %v2892 = vsub.s32 %v2889, %v2891
        %v2893 = vrot.slane %v2806, %v2892
        %v2894 = vcombine.low %v2885, %v2893
        %v2895 = vcombine.high %v2885, %v2893
        %v2897 = vunpack.c.l.s4 1934713408
        %v2898 = vunpack.c.0.s8 %v2897
        %v2899 = vlaneseq
        %v2900 = vshrl.u32 %v2899, 7
        %v2901 = vsub.s32 %v2898, %v2900
        %v2902 = vrot.slane %v2894, %v2901
        %v2904 = vunpack.c.l.s4 1934713408
        %v2905 = vunpack.c.0.s8 %v2904
        %v2906 = vlaneseq
        %v2907 = vshrl.u32 %v2906, 7
        %v2908 = vsub.s32 %v2905, %v2907
        %v2909 = vrot.slane %v2895, %v2908
        %v2910 = vcombine.high %v2902, 0
        %v2911 = vcombine.high %v2909, 0
        %v2914 = vunpack.c.l.s4 1983009808
        %v2915 = vunpack.c.0.s8 %v2914
        %v2916 = vlaneseq
        %v2917 = vshrl.u32 %v2916, 7
        %v2918 = vsub.s32 %v2915, %v2917
        %v2919 = vrot.slane %v2803, %v2918
        %v2922 = vunpack.c.l.s4 1983009808
        %v2923 = vunpack.c.0.s8 %v2922
        %v2924 = vlaneseq
        %v2925 = vshrl.u32 %v2924, 7
        %v2926 = vsub.s32 %v2923, %v2925
        %v2927 = vrot.slane %v2809, %v2926
        %v2928 = vcombine.low %v2919, %v2927
        %v2929 = vcombine.high %v2919, %v2927
        %v2931 = vunpack.c.l.s4 1934713408
        %v2932 = vunpack.c.0.s8 %v2931
        %v2933 = vlaneseq
        %v2934 = vshrl.u32 %v2933, 7
        %v2935 = vsub.s32 %v2932, %v2934
        %v2936 = vrot.slane %v2928, %v2935
        %v2938 = vunpack.c.l.s4 1934713408
        %v2939 = vunpack.c.0.s8 %v2938
        %v2940 = vlaneseq
        %v2941 = vshrl.u32 %v2940, 7
        %v2942 = vsub.s32 %v2939, %v2941
        %v2943 = vrot.slane %v2929, %v2942
        %v2944 = vcombine.high %v2936, 0
        %v2945 = vcombine.high %v2943, 0
        %v2947 = vunpack.c.l.b16 %v2868
        %v2948 = vpack.c.b16 %v2947, %v2947
        %2949 = vrot.lane.b32.xlu0 %v2948, 16
        %v2950 = vpop.permute.xlu0 %2949
        %v2952 = vunpack.c.l.b16 %v2842
        %v2953 = vpack.c.b16 %v2952, %v2952
        %2954 = vrot.lane.b32.xlu0 %v2953, 32
        %v2955 = vpop.permute.xlu0 %2954
        %v2957 = vunpack.c.l.b16 %v2876
        %v2958 = vpack.c.b16 %v2957, %v2957
        %2959 = vrot.lane.b32.xlu0 %v2958, 48
        %v2960 = vpop.permute.xlu0 %2959
        %v2962 = vunpack.c.l.b16 %v2841
        %v2963 = vpack.c.b16 %v2962, %v2962
        %2964 = vrot.lane.b32.xlu0 %v2963, 64
        %v2965 = vpop.permute.xlu0 %2964
        %v2967 = vunpack.c.l.b16 %v2875
        %v2968 = vpack.c.b16 %v2967, %v2967
        %2969 = vrot.lane.b32.xlu0 %v2968, 80
        %v2970 = vpop.permute.xlu0 %2969
        %v2972 = vunpack.c.l.b16 %v2843
        %v2973 = vpack.c.b16 %v2972, %v2972
        %2974 = vrot.lane.b32.xlu0 %v2973, 96
        %v2975 = vpop.permute.xlu0 %2974
        %v2977 = vunpack.c.l.b16 %v2877
        %v2978 = vpack.c.b16 %v2977, %v2977
        %2979 = vrot.lane.b32.xlu0 %v2978, 112
        %v2980 = vpop.permute.xlu0 %2979
        %v2982 = vunpack.c.l.b16 %v2936
        %v2983 = vpack.c.b16 %v2982, %v2982
        %2984 = vrot.lane.b32.xlu0 %v2983, 16
        %v2985 = vpop.permute.xlu0 %2984
        %v2987 = vunpack.c.l.b16 %v2910
        %v2988 = vpack.c.b16 %v2987, %v2987
        %2989 = vrot.lane.b32.xlu0 %v2988, 32
        %v2990 = vpop.permute.xlu0 %2989
        %v2992 = vunpack.c.l.b16 %v2944
        %v2993 = vpack.c.b16 %v2992, %v2992
        %2994 = vrot.lane.b32.xlu0 %v2993, 48
        %v2995 = vpop.permute.xlu0 %2994
        %v2997 = vunpack.c.l.b16 %v2909
        %v2998 = vpack.c.b16 %v2997, %v2997
        %2999 = vrot.lane.b32.xlu0 %v2998, 64
        %v3000 = vpop.permute.xlu0 %2999
        %v3002 = vunpack.c.l.b16 %v2943
        %v3003 = vpack.c.b16 %v3002, %v3002
        %3004 = vrot.lane.b32.xlu0 %v3003, 80
        %v3005 = vpop.permute.xlu0 %3004
        %v3007 = vunpack.c.l.b16 %v2911
        %v3008 = vpack.c.b16 %v3007, %v3007
        %3009 = vrot.lane.b32.xlu0 %v3008, 96
        %v3010 = vpop.permute.xlu0 %3009
        %v3012 = vunpack.c.l.b16 %v2945
        %v3013 = vpack.c.b16 %v3012, %v3012
        %3014 = vrot.lane.b32.xlu0 %v3013, 112
        %v3015 = vpop.permute.xlu0 %3014
        %v3018 = vsel %vm622, %v2834, %v2950
        %v3020 = vsel %vm626, %v3018, %v2955
        %v3022 = vsel %vm629, %v3020, %v2960
        %v3024 = vsel %vm632, %v3022, %v2965
        %v3026 = vsel %vm635, %v3024, %v2970
        %v3028 = vsel %vm638, %v3026, %v2975
        %v3030 = vsel %vm641, %v3028, %v2980
        %v3033 = vsel %vm622, %v2902, %v2985
        %v3035 = vsel %vm626, %v3033, %v2990
        %v3037 = vsel %vm629, %v3035, %v2995
        %v3039 = vsel %vm632, %v3037, %v3000
        %v3041 = vsel %vm635, %v3039, %v3005
        %v3043 = vsel %vm638, %v3041, %v3010
        %v3045 = vsel %vm641, %v3043, %v3015
        %s3046 = scalar_lea.vmem [#allocation2], 14
        %v3047 = vld [vmem:[%s3046] sm:$0x3]
        %v3049 = vsel %vm946, %v3047, 0
        %v3051 = vsel %vm950, %v3030, 0
        %v3053 = vsel %vm950, %v3045, 0
        %3055 = vmatprep.subr.bf16.mxu0 0
        %3056 = vmatpush1.bf16.msra.mxu0 0
        %3057 = vmatprep.subr.bf16.mxu0 0
        %3058 = vmatpush1.bf16.msra.mxu0 0
        %3059 = vmatprep.subr.bf16.mxu0 0
        %3060 = vmatpush1.bf16.msra.mxu0 0
        %3061 = vmatprep.subr.bf16.mxu0 0
        %3062 = vmatpush1.bf16.msra.mxu0 0
        %3063 = vmatprep.subr.bf16.mxu0 0
        %3064 = vmatpush1.bf16.msra.mxu0 0
        %3065 = vmatprep.subr.bf16.mxu0 0
        %3066 = vmatpush1.bf16.msra.mxu0 0
        %3067 = vmatprep.subr.bf16.mxu0 0
        %3068 = vmatpush1.bf16.msra.mxu0 0
        %3069 = vmatprep.subr.bf16.mxu0 %v3053
        %3070 = vmatpush1.bf16.msra.mxu0 %v3051
        %3071 = vmatprep.subr.bf16.mxu0 0
        %3072 = vmatpush2.bf16.msra.mxu0 0
        %3073 = vmatprep.subr.bf16.mxu0 0
        %3074 = vmatpush2.bf16.msra.mxu0 0
        %3075 = vmatprep.subr.bf16.mxu0 0
        %3076 = vmatpush2.bf16.msra.mxu0 0
        %3077 = vmatprep.subr.bf16.mxu0 0
        %3078 = vmatpush2.bf16.msra.mxu0 0
        %3079 = vmatprep.subr.bf16.mxu0 0
        %3080 = vmatpush2.bf16.msra.mxu0 0
        %3081 = vmatprep.subr.bf16.mxu0 0
        %3082 = vmatpush2.bf16.msra.mxu0 0
        %3083 = vmatprep.subr.bf16.mxu0 0
        %3084 = vmatpush2.bf16.msra.mxu0 0
        %3085 = vmatprep.subr.bf16.mxu0 0
        %3086 = vmatpush2.bf16.msra.mxu0 0
        %3087 = vmatprep.mubr.bf16.mxu0 0
        %3088 = vmatmul.mubr.bf16.gmra.mxu0 %v3049
        %v3089 = vpop.f32.mrf.mxu0
        %v3090 = vadd.f32 0.0, %v3089
        %v3091 = vpop.f32.mrf.mxu0
        %v3092 = vadd.f32 0.0, %v3091
        %v3093 = vpop.f32.mrf.mxu0
        %v3094 = vpop.f32.mrf.mxu0
        %3095 = vdwg.mxu0
        %v3096 = vadd.f32 %v2768, %v3090
        %v3097 = vadd.f32 %v2769, %v3092
        %3098 = vrot.lane.b32.xlu0 %v2433, 126
        %v3099 = vpop.permute.xlu0 %3098
        %3100 = vrot.lane.b32.xlu0 %v2436, 126
        %v3101 = vpop.permute.xlu0 %3100
        %3102 = vrot.lane.b32.xlu0 %v2440, 126
        %v3103 = vpop.permute.xlu0 %3102
        %3104 = vrot.lane.b32.xlu0 %v2443, 126
        %v3105 = vpop.permute.xlu0 %3104
        %3106 = vrot.lane.b32.xlu0 %v2447, 126
        %v3107 = vpop.permute.xlu0 %3106
        %3108 = vrot.lane.b32.xlu0 %v2450, 126
        %v3109 = vpop.permute.xlu0 %3108
        %3110 = vrot.lane.b32.xlu0 %v2454, 126
        %v3111 = vpop.permute.xlu0 %3110
        %3112 = vrot.lane.b32.xlu0 %v2457, 126
        %v3113 = vpop.permute.xlu0 %3112
        %v3116 = vpack.i.b16 %v3103, %v3099
        %v3117 = vshrl.u32 %v3099, 16
        %v3118 = vshrl.u32 %v3103, 16
        %v3119 = vpack.i.b16 %v3118, %v3117
        %v3122 = vpack.i.b16 %v3111, %v3107
        %v3123 = vshrl.u32 %v3107, 16
        %v3124 = vshrl.u32 %v3111, 16
        %v3125 = vpack.i.b16 %v3124, %v3123
        %v3128 = vpack.i.b16 %v3105, %v3101
        %v3129 = vshrl.u32 %v3101, 16
        %v3130 = vshrl.u32 %v3105, 16
        %v3131 = vpack.i.b16 %v3130, %v3129
        %v3134 = vpack.i.b16 %v3113, %v3109
        %v3135 = vshrl.u32 %v3109, 16
        %v3136 = vshrl.u32 %v3113, 16
        %v3137 = vpack.i.b16 %v3136, %v3135
        %v3140 = vunpack.c.l.s4 1983009808
        %v3141 = vunpack.c.0.s8 %v3140
        %v3142 = vlaneseq
        %v3143 = vshrl.u32 %v3142, 7
        %v3144 = vsub.s32 %v3141, %v3143
        %v3145 = vrot.slane %v3116, %v3144
        %v3148 = vunpack.c.l.s4 1983009808
        %v3149 = vunpack.c.0.s8 %v3148
        %v3150 = vlaneseq
        %v3151 = vshrl.u32 %v3150, 7
        %v3152 = vsub.s32 %v3149, %v3151
        %v3153 = vrot.slane %v3122, %v3152
        %v3154 = vcombine.low %v3145, %v3153
        %v3155 = vcombine.high %v3145, %v3153
        %v3157 = vunpack.c.l.s4 1934713408
        %v3158 = vunpack.c.0.s8 %v3157
        %v3159 = vlaneseq
        %v3160 = vshrl.u32 %v3159, 7
        %v3161 = vsub.s32 %v3158, %v3160
        %v3162 = vrot.slane %v3154, %v3161
        %v3164 = vunpack.c.l.s4 1934713408
        %v3165 = vunpack.c.0.s8 %v3164
        %v3166 = vlaneseq
        %v3167 = vshrl.u32 %v3166, 7
        %v3168 = vsub.s32 %v3165, %v3167
        %v3169 = vrot.slane %v3155, %v3168
        %v3170 = vcombine.high %v3162, 0
        %v3171 = vcombine.high %v3169, 0
        %v3174 = vunpack.c.l.s4 1983009808
        %v3175 = vunpack.c.0.s8 %v3174
        %v3176 = vlaneseq
        %v3177 = vshrl.u32 %v3176, 7
        %v3178 = vsub.s32 %v3175, %v3177
        %v3179 = vrot.slane %v3119, %v3178
        %v3182 = vunpack.c.l.s4 1983009808
        %v3183 = vunpack.c.0.s8 %v3182
        %v3184 = vlaneseq
        %v3185 = vshrl.u32 %v3184, 7
        %v3186 = vsub.s32 %v3183, %v3185
        %v3187 = vrot.slane %v3125, %v3186
        %v3188 = vcombine.low %v3179, %v3187
        %v3189 = vcombine.high %v3179, %v3187
        %v3191 = vunpack.c.l.s4 1934713408
        %v3192 = vunpack.c.0.s8 %v3191
        %v3193 = vlaneseq
        %v3194 = vshrl.u32 %v3193, 7
        %v3195 = vsub.s32 %v3192, %v3194
        %v3196 = vrot.slane %v3188, %v3195
        %v3198 = vunpack.c.l.s4 1934713408
        %v3199 = vunpack.c.0.s8 %v3198
        %v3200 = vlaneseq
        %v3201 = vshrl.u32 %v3200, 7
        %v3202 = vsub.s32 %v3199, %v3201
        %v3203 = vrot.slane %v3189, %v3202
        %v3204 = vcombine.high %v3196, 0
        %v3205 = vcombine.high %v3203, 0
        %v3208 = vunpack.c.l.s4 1983009808
        %v3209 = vunpack.c.0.s8 %v3208
        %v3210 = vlaneseq
        %v3211 = vshrl.u32 %v3210, 7
        %v3212 = vsub.s32 %v3209, %v3211
        %v3213 = vrot.slane %v3128, %v3212
        %v3216 = vunpack.c.l.s4 1983009808
        %v3217 = vunpack.c.0.s8 %v3216
        %v3218 = vlaneseq
        %v3219 = vshrl.u32 %v3218, 7
        %v3220 = vsub.s32 %v3217, %v3219
        %v3221 = vrot.slane %v3134, %v3220
        %v3222 = vcombine.low %v3213, %v3221
        %v3223 = vcombine.high %v3213, %v3221
        %v3225 = vunpack.c.l.s4 1934713408
        %v3226 = vunpack.c.0.s8 %v3225
        %v3227 = vlaneseq
        %v3228 = vshrl.u32 %v3227, 7
        %v3229 = vsub.s32 %v3226, %v3228
        %v3230 = vrot.slane %v3222, %v3229
        %v3232 = vunpack.c.l.s4 1934713408
        %v3233 = vunpack.c.0.s8 %v3232
        %v3234 = vlaneseq
        %v3235 = vshrl.u32 %v3234, 7
        %v3236 = vsub.s32 %v3233, %v3235
        %v3237 = vrot.slane %v3223, %v3236
        %v3238 = vcombine.high %v3230, 0
        %v3239 = vcombine.high %v3237, 0
        %v3242 = vunpack.c.l.s4 1983009808
        %v3243 = vunpack.c.0.s8 %v3242
        %v3244 = vlaneseq
        %v3245 = vshrl.u32 %v3244, 7
        %v3246 = vsub.s32 %v3243, %v3245
        %v3247 = vrot.slane %v3131, %v3246
        %v3250 = vunpack.c.l.s4 1983009808
        %v3251 = vunpack.c.0.s8 %v3250
        %v3252 = vlaneseq
        %v3253 = vshrl.u32 %v3252, 7
        %v3254 = vsub.s32 %v3251, %v3253
        %v3255 = vrot.slane %v3137, %v3254
        %v3256 = vcombine.low %v3247, %v3255
        %v3257 = vcombine.high %v3247, %v3255
        %v3259 = vunpack.c.l.s4 1934713408
        %v3260 = vunpack.c.0.s8 %v3259
        %v3261 = vlaneseq
        %v3262 = vshrl.u32 %v3261, 7
        %v3263 = vsub.s32 %v3260, %v3262
        %v3264 = vrot.slane %v3256, %v3263
        %v3266 = vunpack.c.l.s4 1934713408
        %v3267 = vunpack.c.0.s8 %v3266
        %v3268 = vlaneseq
        %v3269 = vshrl.u32 %v3268, 7
        %v3270 = vsub.s32 %v3267, %v3269
        %v3271 = vrot.slane %v3257, %v3270
        %v3272 = vcombine.high %v3264, 0
        %v3273 = vcombine.high %v3271, 0
        %v3275 = vunpack.c.l.b16 %v3196
        %v3276 = vpack.c.b16 %v3275, %v3275
        %3277 = vrot.lane.b32.xlu0 %v3276, 16
        %v3278 = vpop.permute.xlu0 %3277
        %v3280 = vunpack.c.l.b16 %v3170
        %v3281 = vpack.c.b16 %v3280, %v3280
        %3282 = vrot.lane.b32.xlu0 %v3281, 32
        %v3283 = vpop.permute.xlu0 %3282
        %v3285 = vunpack.c.l.b16 %v3204
        %v3286 = vpack.c.b16 %v3285, %v3285
        %3287 = vrot.lane.b32.xlu0 %v3286, 48
        %v3288 = vpop.permute.xlu0 %3287
        %v3290 = vunpack.c.l.b16 %v3169
        %v3291 = vpack.c.b16 %v3290, %v3290
        %3292 = vrot.lane.b32.xlu0 %v3291, 64
        %v3293 = vpop.permute.xlu0 %3292
        %v3295 = vunpack.c.l.b16 %v3203
        %v3296 = vpack.c.b16 %v3295, %v3295
        %3297 = vrot.lane.b32.xlu0 %v3296, 80
        %v3298 = vpop.permute.xlu0 %3297
        %v3300 = vunpack.c.l.b16 %v3171
        %v3301 = vpack.c.b16 %v3300, %v3300
        %3302 = vrot.lane.b32.xlu0 %v3301, 96
        %v3303 = vpop.permute.xlu0 %3302
        %v3305 = vunpack.c.l.b16 %v3205
        %v3306 = vpack.c.b16 %v3305, %v3305
        %3307 = vrot.lane.b32.xlu0 %v3306, 112
        %v3308 = vpop.permute.xlu0 %3307
        %v3310 = vunpack.c.l.b16 %v3264
        %v3311 = vpack.c.b16 %v3310, %v3310
        %3312 = vrot.lane.b32.xlu0 %v3311, 16
        %v3313 = vpop.permute.xlu0 %3312
        %v3315 = vunpack.c.l.b16 %v3238
        %v3316 = vpack.c.b16 %v3315, %v3315
        %3317 = vrot.lane.b32.xlu0 %v3316, 32
        %v3318 = vpop.permute.xlu0 %3317
        %v3320 = vunpack.c.l.b16 %v3272
        %v3321 = vpack.c.b16 %v3320, %v3320
        %3322 = vrot.lane.b32.xlu0 %v3321, 48
        %v3323 = vpop.permute.xlu0 %3322
        %v3325 = vunpack.c.l.b16 %v3237
        %v3326 = vpack.c.b16 %v3325, %v3325
        %3327 = vrot.lane.b32.xlu0 %v3326, 64
        %v3328 = vpop.permute.xlu0 %3327
        %v3330 = vunpack.c.l.b16 %v3271
        %v3331 = vpack.c.b16 %v3330, %v3330
        %3332 = vrot.lane.b32.xlu0 %v3331, 80
        %v3333 = vpop.permute.xlu0 %3332
        %v3335 = vunpack.c.l.b16 %v3239
        %v3336 = vpack.c.b16 %v3335, %v3335
        %3337 = vrot.lane.b32.xlu0 %v3336, 96
        %v3338 = vpop.permute.xlu0 %3337
        %v3340 = vunpack.c.l.b16 %v3273
        %v3341 = vpack.c.b16 %v3340, %v3340
        %3342 = vrot.lane.b32.xlu0 %v3341, 112
        %v3343 = vpop.permute.xlu0 %3342
        %v3346 = vsel %vm622, %v3162, %v3278
        %v3348 = vsel %vm626, %v3346, %v3283
        %v3350 = vsel %vm629, %v3348, %v3288
        %v3352 = vsel %vm632, %v3350, %v3293
        %v3354 = vsel %vm635, %v3352, %v3298
        %v3356 = vsel %vm638, %v3354, %v3303
        %v3358 = vsel %vm641, %v3356, %v3308
        %v3361 = vsel %vm622, %v3230, %v3313
        %v3363 = vsel %vm626, %v3361, %v3318
        %v3365 = vsel %vm629, %v3363, %v3323
        %v3367 = vsel %vm632, %v3365, %v3328
        %v3369 = vsel %vm635, %v3367, %v3333
        %v3371 = vsel %vm638, %v3369, %v3338
        %v3373 = vsel %vm641, %v3371, %v3343
        %s3374 = scalar_lea.vmem [#allocation2], 16
        %v3375 = vld [vmem:[%s3374] sm:$0x3]
        %v3377 = vsel %vm946, %v3375, 0
        %v3379 = vsel %vm950, %v3358, 0
        %v3381 = vsel %vm950, %v3373, 0
        %3383 = vmatprep.subr.bf16.mxu0 0
        %3384 = vmatpush1.bf16.msra.mxu0 0
        %3385 = vmatprep.subr.bf16.mxu0 0
        %3386 = vmatpush1.bf16.msra.mxu0 0
        %3387 = vmatprep.subr.bf16.mxu0 0
        %3388 = vmatpush1.bf16.msra.mxu0 0
        %3389 = vmatprep.subr.bf16.mxu0 0
        %3390 = vmatpush1.bf16.msra.mxu0 0
        %3391 = vmatprep.subr.bf16.mxu0 0
        %3392 = vmatpush1.bf16.msra.mxu0 0
        %3393 = vmatprep.subr.bf16.mxu0 0
        %3394 = vmatpush1.bf16.msra.mxu0 0
        %3395 = vmatprep.subr.bf16.mxu0 0
        %3396 = vmatpush1.bf16.msra.mxu0 0
        %3397 = vmatprep.subr.bf16.mxu0 %v3381
        %3398 = vmatpush1.bf16.msra.mxu0 %v3379
        %3399 = vmatprep.subr.bf16.mxu0 0
        %3400 = vmatpush2.bf16.msra.mxu0 0
        %3401 = vmatprep.subr.bf16.mxu0 0
        %3402 = vmatpush2.bf16.msra.mxu0 0
        %3403 = vmatprep.subr.bf16.mxu0 0
        %3404 = vmatpush2.bf16.msra.mxu0 0
        %3405 = vmatprep.subr.bf16.mxu0 0
        %3406 = vmatpush2.bf16.msra.mxu0 0
        %3407 = vmatprep.subr.bf16.mxu0 0
        %3408 = vmatpush2.bf16.msra.mxu0 0
        %3409 = vmatprep.subr.bf16.mxu0 0
        %3410 = vmatpush2.bf16.msra.mxu0 0
        %3411 = vmatprep.subr.bf16.mxu0 0
        %3412 = vmatpush2.bf16.msra.mxu0 0
        %3413 = vmatprep.subr.bf16.mxu0 0
        %3414 = vmatpush2.bf16.msra.mxu0 0
        %3415 = vmatprep.mubr.bf16.mxu0 0
        %3416 = vmatmul.mubr.bf16.gmra.mxu0 %v3377
        %v3417 = vpop.f32.mrf.mxu0
        %v3418 = vadd.f32 0.0, %v3417
        %v3419 = vpop.f32.mrf.mxu0
        %v3420 = vadd.f32 0.0, %v3419
        %v3421 = vpop.f32.mrf.mxu0
        %v3422 = vpop.f32.mrf.mxu0
        %3423 = vdwg.mxu0
        %v3424 = vadd.f32 %v3096, %v3418
        %v3425 = vadd.f32 %v3097, %v3420
        %3427 = vrot.lane.b32.xlu0 %v3424, 112
        %v3428 = vpop.permute.xlu0 %3427
        %3430 = vrot.lane.b32.xlu0 %v3424, 96
        %v3431 = vpop.permute.xlu0 %3430
        %3433 = vrot.lane.b32.xlu0 %v3424, 80
        %v3434 = vpop.permute.xlu0 %3433
        %3436 = vrot.lane.b32.xlu0 %v3424, 64
        %v3437 = vpop.permute.xlu0 %3436
        %3439 = vrot.lane.b32.xlu0 %v3424, 48
        %v3440 = vpop.permute.xlu0 %3439
        %3442 = vrot.lane.b32.xlu0 %v3424, 32
        %v3443 = vpop.permute.xlu0 %3442
        %3445 = vrot.lane.b32.xlu0 %v3424, 16
        %v3446 = vpop.permute.xlu0 %3445
        %3449 = vrot.lane.b32.xlu0 %v3425, 112
        %v3450 = vpop.permute.xlu0 %3449
        %3452 = vrot.lane.b32.xlu0 %v3425, 96
        %v3453 = vpop.permute.xlu0 %3452
        %3455 = vrot.lane.b32.xlu0 %v3425, 80
        %v3456 = vpop.permute.xlu0 %3455
        %3458 = vrot.lane.b32.xlu0 %v3425, 64
        %v3459 = vpop.permute.xlu0 %3458
        %3461 = vrot.lane.b32.xlu0 %v3425, 48
        %v3462 = vpop.permute.xlu0 %3461
        %3464 = vrot.lane.b32.xlu0 %v3425, 32
        %v3465 = vpop.permute.xlu0 %3464
        %3467 = vrot.lane.b32.xlu0 %v3425, 16
        %v3468 = vpop.permute.xlu0 %3467
        %v3470 = vcombine.low %v3424, %v3431
        %v3472 = vunpack.c.l.s4 1983009808
        %v3473 = vunpack.c.0.s8 %v3472
        %v3474 = vlaneseq
        %v3475 = vshrl.u32 %v3474, 7
        %v3476 = vsub.s32 %v3473, %v3475
        %v3477 = vrot.slane %v3470, %v3476
        %v3478 = vcombine.low %v3428, %v3434
        %v3480 = vunpack.c.l.s4 1983009808
        %v3481 = vunpack.c.0.s8 %v3480
        %v3482 = vlaneseq
        %v3483 = vshrl.u32 %v3482, 7
        %v3484 = vsub.s32 %v3481, %v3483
        %v3485 = vrot.slane %v3478, %v3484
        %v3486 = vcombine.low %v3437, %v3443
        %v3488 = vunpack.c.l.s4 1983009808
        %v3489 = vunpack.c.0.s8 %v3488
        %v3490 = vlaneseq
        %v3491 = vshrl.u32 %v3490, 7
        %v3492 = vsub.s32 %v3489, %v3491
        %v3493 = vrot.slane %v3486, %v3492
        %v3494 = vcombine.low %v3440, %v3446
        %v3496 = vunpack.c.l.s4 1983009808
        %v3497 = vunpack.c.0.s8 %v3496
        %v3498 = vlaneseq
        %v3499 = vshrl.u32 %v3498, 7
        %v3500 = vsub.s32 %v3497, %v3499
        %v3501 = vrot.slane %v3494, %v3500
        %v3502 = vcombine.low %v3477, %v3485
        %v3503 = vcombine.high %v3477, %v3485
        %v3505 = vunpack.c.l.s4 1934713408
        %v3506 = vunpack.c.0.s8 %v3505
        %v3507 = vlaneseq
        %v3508 = vshrl.u32 %v3507, 7
        %v3509 = vsub.s32 %v3506, %v3508
        %v3510 = vrot.slane %v3502, %v3509
        %v3512 = vunpack.c.l.s4 1934713408
        %v3513 = vunpack.c.0.s8 %v3512
        %v3514 = vlaneseq
        %v3515 = vshrl.u32 %v3514, 7
        %v3516 = vsub.s32 %v3513, %v3515
        %v3517 = vrot.slane %v3503, %v3516
        %v3518 = vcombine.low %v3493, %v3501
        %v3519 = vcombine.high %v3493, %v3501
        %v3521 = vunpack.c.l.s4 1934713408
        %v3522 = vunpack.c.0.s8 %v3521
        %v3523 = vlaneseq
        %v3524 = vshrl.u32 %v3523, 7
        %v3525 = vsub.s32 %v3522, %v3524
        %v3526 = vrot.slane %v3518, %v3525
        %v3528 = vunpack.c.l.s4 1934713408
        %v3529 = vunpack.c.0.s8 %v3528
        %v3530 = vlaneseq
        %v3531 = vshrl.u32 %v3530, 7
        %v3532 = vsub.s32 %v3529, %v3531
        %v3533 = vrot.slane %v3519, %v3532
        %v3534 = vcombine.low %v3510, %v3526
        %v3535 = vcombine.high %v3510, %v3526
        %v3536 = vcombine.low %v3517, %v3533
        %v3537 = vcombine.high %v3517, %v3533
        %v3538 = vcombine.low %v3425, %v3453
        %v3540 = vunpack.c.l.s4 1983009808
        %v3541 = vunpack.c.0.s8 %v3540
        %v3542 = vlaneseq
        %v3543 = vshrl.u32 %v3542, 7
        %v3544 = vsub.s32 %v3541, %v3543
        %v3545 = vrot.slane %v3538, %v3544
        %v3546 = vcombine.low %v3450, %v3456
        %v3548 = vunpack.c.l.s4 1983009808
        %v3549 = vunpack.c.0.s8 %v3548
        %v3550 = vlaneseq
        %v3551 = vshrl.u32 %v3550, 7
        %v3552 = vsub.s32 %v3549, %v3551
        %v3553 = vrot.slane %v3546, %v3552
        %v3554 = vcombine.low %v3459, %v3465
        %v3556 = vunpack.c.l.s4 1983009808
        %v3557 = vunpack.c.0.s8 %v3556
        %v3558 = vlaneseq
        %v3559 = vshrl.u32 %v3558, 7
        %v3560 = vsub.s32 %v3557, %v3559
        %v3561 = vrot.slane %v3554, %v3560
        %v3562 = vcombine.low %v3462, %v3468
        %v3564 = vunpack.c.l.s4 1983009808
        %v3565 = vunpack.c.0.s8 %v3564
        %v3566 = vlaneseq
        %v3567 = vshrl.u32 %v3566, 7
        %v3568 = vsub.s32 %v3565, %v3567
        %v3569 = vrot.slane %v3562, %v3568
        %v3570 = vcombine.low %v3545, %v3553
        %v3571 = vcombine.high %v3545, %v3553
        %v3573 = vunpack.c.l.s4 1934713408
        %v3574 = vunpack.c.0.s8 %v3573
        %v3575 = vlaneseq
        %v3576 = vshrl.u32 %v3575, 7
        %v3577 = vsub.s32 %v3574, %v3576
        %v3578 = vrot.slane %v3570, %v3577
        %v3580 = vunpack.c.l.s4 1934713408
        %v3581 = vunpack.c.0.s8 %v3580
        %v3582 = vlaneseq
        %v3583 = vshrl.u32 %v3582, 7
        %v3584 = vsub.s32 %v3581, %v3583
        %v3585 = vrot.slane %v3571, %v3584
        %v3586 = vcombine.low %v3561, %v3569
        %v3587 = vcombine.high %v3561, %v3569
        %v3589 = vunpack.c.l.s4 1934713408
        %v3590 = vunpack.c.0.s8 %v3589
        %v3591 = vlaneseq
        %v3592 = vshrl.u32 %v3591, 7
        %v3593 = vsub.s32 %v3590, %v3592
        %v3594 = vrot.slane %v3586, %v3593
        %v3596 = vunpack.c.l.s4 1934713408
        %v3597 = vunpack.c.0.s8 %v3596
        %v3598 = vlaneseq
        %v3599 = vshrl.u32 %v3598, 7
        %v3600 = vsub.s32 %v3597, %v3599
        %v3601 = vrot.slane %v3587, %v3600
        %v3602 = vcombine.low %v3578, %v3594
        %v3603 = vcombine.high %v3578, %v3594
        %v3604 = vcombine.low %v3585, %v3601
        %v3605 = vcombine.high %v3585, %v3601
        %3606 = vst.msk [vmem:[%s234] sm:$0xff] %vm622, %v3534
        %3607 = vst.msk [vmem:[%s234 + $0x8] sm:$0xff] %vm622, %v3602
        %3608 = vst.msk [vmem:[%s234 + $0x10] sm:$0xff] %vm622, %v3535
        %3609 = vst.msk [vmem:[%s234 + $0x18] sm:$0xff] %vm622, %v3603
        %3610 = vst.msk [vmem:[%s234 + $0x20] sm:$0xff] %vm622, %v3536
        %3611 = vst.msk [vmem:[%s234 + $0x28] sm:$0xff] %vm622, %v3604
        %3612 = vst.msk [vmem:[%s234 + $0x30] sm:$0xff] %vm622, %v3537
        %3613 = vst.msk [vmem:[%s234 + $0x38] sm:$0xff] %vm622, %v3605
        %s3614 = sand.u32 %s139, 1
        %s3615 = scalar_lea.sflag [#allocation4], %s3614
        %s3616 = sand.u32 %s139, 1
        %s3617 = smul.addr %s3616, 64
        %s3618 = scalar_lea.vmem [#allocation3], %s3617
        // Predicated region
        $region37: #{tpu_custom_call.1} parent=31 // pred_check
          %p3619 = pneg %p149
        $region38: #{tpu_custom_call.1} parent=31 // pred_check_branch
          %3621 = sbr.rel (%p3619) target = $region40
        $region39: #{tpu_custom_call.1} parent=31 // pred_region
          %s3622 = sadd.s32 %s25, %s26
          %s3623 = smul.u32 4, %s23
          %s3625 = ssub.s32 1024, 1024
          %3626 = vsyncadd %s3615, %s3625
          %s3627 = smul.addr %s3622, 2
          %s3628 = smul.addr %s3623, 2
          %s3629 = sadd.s32 %s3627, %s3628
          %s3630 = smul.addr %s24, 8
          %s3631 = sadd.s32 %s3629, %s3630
          %s3632 = smul.addr %s3631, 128
          %s3633 = scalar_lea.hbm %s3, %s3632
          %s3634 = sshll.u32 %s3618, 4
          %s3635 = int_to_ptr.vmem [resolvable:$true] %s3634
          %3640 = dma.vmem_to_hbm [thread:$0]  %s3635, 1024, %s3633, %s3615, 128, 128, 8
        $region40: #{tpu_custom_call.1} parent=31 // pred_fallthru
          _
      $region32: #{tpu_custom_call.1} parent=5 // pred_fallthru
        _
      %p3641 = scmp.le.s32.totalorder 2, %s12
      // Predicated region
      $region41: #{tpu_custom_call.1} parent=5 // pred_check
        %p3642 = pneg %p3641
      $region42: #{tpu_custom_call.1} parent=5 // pred_check_branch
        %3644 = sbr.rel (%p3642) target = $region44
      $region43: #{tpu_custom_call.1} parent=5 // pred_region
        %s3645 = ssub.s32 %s12, 2
        // Predicated region
        $region45: #{tpu_custom_call.1} parent=43 // pred_check
          %p3646 = pneg %p155
        $region46: #{tpu_custom_call.1} parent=43 // pred_check_branch
          %3648 = sbr.rel (%p3646) target = $region48
        $region47: #{tpu_custom_call.1} parent=43 // pred_region
          %s3649 = sand.u32 %s140, 1
          %s3650 = scalar_lea.sflag [#allocation4], %s3649
          %s3651 = sand.u32 %s140, 1
          %s3652 = smul.addr %s3651, 64
          %s3653 = scalar_lea.vmem [#allocation3], %s3652
          %3654 = dma.done %s3650, 1024
        $region48: #{tpu_custom_call.1} parent=43 // pred_fallthru
          _
      $region44: #{tpu_custom_call.1} parent=5 // pred_fallthru
        _
    $region6: #{tpu_custom_call.1} parent=1 // loop_footer
      %s16 = sadd.s32 1, %s12
    $region7: #{tpu_custom_call.1} parent=1 // loop_footer_branch
      %11 = sbr.rel target = $region3
    $region8: #{tpu_custom_call.1} parent=1 // loop_exit
      _
    %3655 = vsyncpa [#allocation4], 1
    %s3656 = scalar_lea.sflag [#allocation4], 1
    %3657 = vsyncpa %s3656, 1

</llo_original>
